<compile_context>
chip_gen: v7x
topology: tpu7x:2x2x1
jax: 0.10.0
libtpu: 0.0.40
codegen_flags: <defaults>
</compile_context>

<pallas_src>
import math

import jax
import jax.numpy as jnp
from jax.experimental import pallas as pl
from jax.experimental.pallas import tpu as pltpu

COVET_DIM = 32 * 32   # covet_sqrt output is [N, 32, 32] -> flattened to 1024
ROW_ALIGN = 16        # bf16 sublane tiling (16, 128); also valid for f32


def _round_up(v, m):
    return ((v + m - 1) // m) * m


def _tpu_tuning():
    """Per-generation VMEM budget & row-block default (v5e/v6e: 128 MiB, v7x: 64 MiB)."""
    vmem_cap = 64 * 1024 * 1024
    try:
        info = pltpu.get_tpu_info()
        vmem_cap = int(getattr(info, "vmem_capacity_bytes", vmem_cap))
    except Exception:
        pass
    vmem_limit = min((vmem_cap * 3) // 4, 112 * 1024 * 1024)
    block_rows = 512 if vmem_cap >= 96 * 1024 * 1024 else 256
    return vmem_limit, block_rows


# -----------------------------------------------------------------------------
# Pallas kernel: fused drop + (split) Linear -> ReLU -> Linear over a row block.
# -----------------------------------------------------------------------------
def _covet_mlp_kernel(x_ref, idx_ref, res_ref,
                      w1x_ref, w1r_ref, b1_ref, w2_ref, b2_ref,
                      recon_ref):
    # In-kernel drop: rebuild the per-row mask from the tiny drop indices and zero
    # those genes with a select (same semantics as the reference's boolean-mask set).
    x = x_ref[...]
    idx = idx_ref[...]                                        # [tq, num_drop] int32
    col = jax.lax.broadcasted_iota(jnp.int32, x.shape, 1)     # gene index per lane
    zeros = jnp.zeros_like(x)
    for j in range(idx.shape[1]):                             # num_drop: small, static
        x = jnp.where(col == idx[:, j:j + 1], zeros, x)

    # hidden = cat(drop_x, res) @ W1.T + b1, computed as two MXU matmuls summed into
    # one f32 accumulator (weights pre-transposed + split in the wrapper, so no
    # in-kernel concat or transpose).
    h = jnp.dot(x, w1x_ref[...], preferred_element_type=jnp.float32)
    h = h + jnp.dot(res_ref[...], w1r_ref[...], preferred_element_type=jnp.float32)
    h = jnp.maximum(h + b1_ref[...], 0.0)                     # bias + ReLU in f32

    # recon = relu(hidden) @ W2.T + b2
    out = jnp.dot(h.astype(w2_ref.dtype), w2_ref[...],
                  preferred_element_type=jnp.float32)
    recon_ref[...] = (out + b2_ref[...]).astype(recon_ref.dtype)


# -----------------------------------------------------------------------------
# Wrapper: weight prep, padding, pallas_call, and the data-dependent gathers.
# -----------------------------------------------------------------------------
def covet_imputation_forward(x, drop_idx, res, w1, b1, w2, b2, *,
                             compute_dtype=jnp.bfloat16,
                             block_rows=None, vmem_limit_bytes=None):
    """Forward of _CovetImputation given precomputed drop indices & covet features.

    x        : [N, input_dim]          raw (preprocessed) expression
    drop_idx : [N, num_drop] int       per-row dropped gene indices (distinct)
    res      : [N, 1024]               covet_sqrt features (flattened 32x32)
    w1, b1   : [hidden, input_dim+1024], [hidden]   first Linear (PyTorch layout)
    w2, b2   : [input_dim, hidden], [input_dim]     second Linear
    returns (x_init, x_recon) with shape [N, num_drop] each.
    """
    n, input_dim = x.shape
    hidden_dim = w1.shape[0]
    num_drop = drop_idx.shape[1]
    assert w1.shape == (hidden_dim, input_dim + COVET_DIM)
    assert w2.shape == (input_dim, hidden_dim)
    assert res.shape == (n, COVET_DIM)

    auto_vmem, auto_rows = _tpu_tuning()
    if vmem_limit_bytes is None:
        vmem_limit_bytes = auto_vmem
    if block_rows is None:
        block_rows = auto_rows

    # --- weight prep: transpose + split + bf16 cast + pad (would be done once at
    #     parameter-load time in a real model) --------------------------------------
    din_p = _round_up(input_dim, 128)
    dh_p = _round_up(hidden_dim, 128)
    w1_t = w1.T.astype(compute_dtype)                   # [input_dim + 1024, hidden]
    w1x_p = jnp.pad(w1_t[:input_dim],
                    ((0, din_p - input_dim), (0, dh_p - hidden_dim)))
    w1r_p = jnp.pad(w1_t[input_dim:], ((0, 0), (0, dh_p - hidden_dim)))
    w2_p = jnp.pad(w2.T.astype(compute_dtype),
                   ((0, dh_p - hidden_dim), (0, din_p - input_dim)))
    b1_p = jnp.pad(b1.astype(jnp.float32), (0, dh_p - hidden_dim)).reshape(1, dh_p)
    b2_p = jnp.pad(b2.astype(jnp.float32), (0, din_p - input_dim)).reshape(1, din_p)
    # TODO(synk): if bf16 W1x/W2 still exceed the v7x VMEM budget even single-buffered,
    # add a second "arbitrary" grid axis over dh_p/din_p with an f32 scratch accumulator.

    # --- row tiling: 16-aligned blocks, >= 2 grid steps (v7x has 2 TensorCores) -----
    tq = min(block_rows, max(ROW_ALIGN, _round_up(-(-n // 2), ROW_ALIGN)))
    n_pad = max(_round_up(n, tq), 2 * tq)
    n_blocks = n_pad // tq

    # --- one fused pad + cast pass per activation stream (no mask stream at all) ----
    x_p = jnp.pad(x.astype(compute_dtype),
                  ((0, n_pad - n), (0, din_p - input_dim)))
    res_p = jnp.pad(res.astype(compute_dtype), ((0, n_pad - n), (0, 0)))
    idx_p = jnp.pad(drop_idx.astype(jnp.int32), ((0, n_pad - n), (0, 0)))

    row_blk = lambda cols: pl.BlockSpec((tq, cols), lambda i: (i, 0))

    def _run(single_buffer_weights):
        if single_buffer_weights:
            # Constant-index weight/bias blocks: single-buffer (saves ~half the
            # resident weight VMEM; matters on v7x's 64 MiB/TC).
            full_blk = lambda r, c: pl.BlockSpec((r, c), lambda i: (0, 0),
                                                 pipeline_mode=pl.Buffered(1))
        else:
            full_blk = lambda r, c: pl.BlockSpec((r, c), lambda i: (0, 0))
        return pl.pallas_call(
            _covet_mlp_kernel,
            out_shape=jax.ShapeDtypeStruct((n_pad, din_p), compute_dtype),
            grid_spec=pltpu.PrefetchScalarGridSpec(
                num_scalar_prefetch=0,
                grid=(n_blocks,),
                in_specs=[
                    row_blk(din_p),               # x (bf16)
                    row_blk(num_drop),            # drop indices (int32, tiny)
                    row_blk(COVET_DIM),           # covet features (bf16)
                    full_blk(din_p, dh_p),        # W1 x-part, transposed (bf16)
                    full_blk(COVET_DIM, dh_p),    # W1 covet-part, transposed (bf16)
                    full_blk(1, dh_p),            # b1 (f32)
                    full_blk(dh_p, din_p),        # W2, transposed (bf16)
                    full_blk(1, din_p),           # b2 (f32)
                ],
                out_specs=row_blk(din_p),         # recon (bf16 writeback)
            ),
            compiler_params=pltpu.CompilerParams(
                dimension_semantics=("parallel",),
                vmem_limit_bytes=int(vmem_limit_bytes),
            ),
        )(x_p, idx_p, res_p, w1x_p, w1r_p, b1_p, w2_p, b2_p)

    try:
        recon_pad = _run(True)
    except Exception:
        # Fallback for JAX versions without BlockSpec pipeline_mode support.
        recon_pad = _run(False)

    recon = recon_pad[:n, :input_dim]

    # TODO(synk): the boolean-mask gather x[drop_mask].reshape(N, -1) is a
    # data-dependent gather; done with take_along_axis in the wrapper (row-major
    # masked order == ascending per-row column order). An in-kernel lane gather of
    # only the num_drop recon columns would cut writeback further but stays here.
    sorted_idx = jnp.sort(drop_idx, axis=1)
    x_init = jnp.take_along_axis(x, sorted_idx, axis=1)
    x_recon = jnp.take_along_axis(recon, sorted_idx, axis=1).astype(x.dtype)
    return x_init, x_recon


# -----------------------------------------------------------------------------
# Host-side helpers (no clean Pallas equivalent; plain JAX).
# -----------------------------------------------------------------------------
def make_drop_indices(key, n_rows, gene_list, num_drop):
    """Per-row random choice of `num_drop` distinct genes from gene_list."""
    # TODO(synk): replaces torch.randperm-per-row in _CovetImputation.drop.
    keys = jax.random.split(key, n_rows)

    def one_row(k):
        perm = jax.random.permutation(k, gene_list.shape[0])[:num_drop]
        return gene_list[perm]

    return jax.vmap(one_row)(keys)


def covet_sqrt_jax(hvg, coords, n_neighs):
    """k-NN shifted-covariance matrix square root, [N, 32, 32]."""
    # TODO(synk): the reference calls an external numpy `covet_sqrt`; this is a
    # plain-JAX re-implementation (kNN shifted covariance + eigh-based sqrt) run
    # outside the Pallas kernel.
    n = hvg.shape[0]
    d2 = jnp.sum((coords[:, None, :] - coords[None, :, :]) ** 2, axis=-1)
    d2 = d2 + jnp.eye(n, dtype=d2.dtype) * 1e9            # exclude self
    _, idx = jax.lax.top_k(-d2, n_neighs)                  # [N, k] nearest
    neigh = hvg[idx]                                       # [N, k, 32]
    centered = neigh - hvg[:, None, :]
    cov = jnp.einsum("nkd,nke->nde", centered, centered) / n_neighs
    w, v = jnp.linalg.eigh(cov)
    w = jnp.clip(w, 0.0, None)
    return jnp.einsum("nde,ne,nfe->ndf", v, jnp.sqrt(w), v)


# -----------------------------------------------------------------------------
# Demo / correctness check.
# -----------------------------------------------------------------------------
if __name__ == "__main__":
    key = jax.random.PRNGKey(0)
    k_x, k_c, k_h, k_w1, k_b1, k_w2, k_b2, k_drop = jax.random.split(key, 8)

    n_cells = 16
    input_dim = 64
    hidden_dim = 32
    n_neighs = 8
    imputation_rate = 0.25
    n_hvg = 32  # covet panel size -> 32x32 covariance

    x = jax.random.normal(k_x, (n_cells, input_dim), jnp.float32)
    coordinates = jax.random.uniform(k_c, (n_cells, 2), jnp.float32)
    hvg = jax.random.normal(k_h, (n_cells, n_hvg), jnp.float32)
    gene_list = jnp.arange(0, 32, 2, dtype=jnp.int32)        # 16 candidate genes
    num_drop = int(imputation_rate * gene_list.shape[0])     # = 4

    # PyTorch nn.Linear init: U(-1/sqrt(fan_in), 1/sqrt(fan_in)), weight [out, in].
    fan1 = input_dim + COVET_DIM
    b1_bound = 1.0 / math.sqrt(fan1)
    b2_bound = 1.0 / math.sqrt(hidden_dim)
    w1 = jax.random.uniform(k_w1, (hidden_dim, fan1), jnp.float32, -b1_bound, b1_bound)
    b1 = jax.random.uniform(k_b1, (hidden_dim,), jnp.float32, -b1_bound, b1_bound)
    w2 = jax.random.uniform(k_w2, (input_dim, hidden_dim), jnp.float32,
                            -b2_bound, b2_bound)
    b2 = jax.random.uniform(k_b2, (input_dim,), jnp.float32, -b2_bound, b2_bound)

    drop_idx = make_drop_indices(k_drop, n_cells, gene_list, num_drop)
    res = covet_sqrt_jax(hvg, coordinates, n_neighs).reshape(n_cells, COVET_DIM)

    x_init, x_recon = covet_imputation_forward(x, drop_idx, res, w1, b1, w2, b2)
    jax.block_until_ready((x_init, x_recon))

    # ---- pure-JAX reference of the same forward (with matching bf16 operand rounding)
    q = lambda a: a.astype(jnp.bfloat16).astype(jnp.float32)
    drop_mask = jnp.zeros((n_cells, input_dim), bool).at[
        jnp.arange(n_cells)[:, None], drop_idx].set(True)
    drop_x = jnp.where(drop_mask, 0.0, q(x))
    hidden = jnp.concatenate([drop_x, q(res)], axis=1)
    h_ref = jnp.maximum(hidden @ q(w1).T + b1, 0.0)
    recon_ref = q(q(h_ref) @ q(w2).T + b2)
    sidx = jnp.sort(drop_idx, axis=1)
    x_init_ref = jnp.take_along_axis(x, sidx, axis=1)
    x_recon_ref = jnp.take_along_axis(recon_ref, sidx, axis=1)

    assert x_init.shape == (n_cells, num_drop)
    assert x_recon.shape == (n_cells, num_drop)
    assert jnp.allclose(x_init, x_init_ref, atol=1e-6)
    assert jnp.allclose(x_recon, x_recon_ref, atol=2e-2, rtol=2e-2), (
        float(jnp.max(jnp.abs(x_recon - x_recon_ref))))

    print("KERNEL_OK")
</pallas_src>

<mosaic_0001>
module attributes {stable_mosaic.version = 11 : i64} {
  func.func @_covet_mlp_kernel(%arg0: i32, %arg1: memref<16x128xbf16, #tpu.memory_space<vmem>>, %arg2: memref<16x4xi32, #tpu.memory_space<vmem>>, %arg3: memref<16x1024xbf16, #tpu.memory_space<vmem>>, %arg4: memref<128x128xbf16, #tpu.memory_space<vmem>>, %arg5: memref<1024x128xbf16, #tpu.memory_space<vmem>>, %arg6: memref<1x128xf32, #tpu.memory_space<vmem>>, %arg7: memref<128x128xbf16, #tpu.memory_space<vmem>>, %arg8: memref<1x128xf32, #tpu.memory_space<vmem>>, %arg9: memref<16x128xbf16, #tpu.memory_space<vmem>>) attributes {dimension_semantics = [#tpu.dimension_semantics<parallel>], iteration_bounds = array<i64: 2>, scalar_prefetch = 0 : i64, scratch_operands = 0 : i64, tpu.core_type = #tpu.core_type<tc>, window_params = [{transform_indices = @transform_0, window_bounds = array<i64: 16, 128>}, {transform_indices = @transform_1, window_bounds = array<i64: 16, 4>}, {transform_indices = @transform_2, window_bounds = array<i64: 16, 1024>}, {pipeline_mode = #tpu.pipeline_mode<synchronous>, transform_indices = @transform_3, window_bounds = array<i64: 128, 128>}, {pipeline_mode = #tpu.pipeline_mode<synchronous>, transform_indices = @transform_4, window_bounds = array<i64: 1024, 128>}, {pipeline_mode = #tpu.pipeline_mode<synchronous>, transform_indices = @transform_5, window_bounds = array<i64: 1, 128>}, {pipeline_mode = #tpu.pipeline_mode<synchronous>, transform_indices = @transform_6, window_bounds = array<i64: 128, 128>}, {pipeline_mode = #tpu.pipeline_mode<synchronous>, transform_indices = @transform_7, window_bounds = array<i64: 1, 128>}, {transform_indices = @transform_8, window_bounds = array<i64: 16, 128>}]} {
    %c0 = arith.constant 0 : index
    %c0_0 = arith.constant 0 : index
    %0 = vector.load %arg1[%c0, %c0_0] : memref<16x128xbf16, #tpu.memory_space<vmem>>, vector<16x128xbf16>
    %c0_1 = arith.constant 0 : index
    %c0_2 = arith.constant 0 : index
    %1 = vector.load %arg2[%c0_1, %c0_2] : memref<16x4xi32, #tpu.memory_space<vmem>>, vector<16x4xi32>
    %2 = tpu.iota {dimensions = array<i32: 1>} : vector<16x128xi32>
    %cst = arith.constant 0.000000e+00 : bf16
    %3 = vector.broadcast %cst : bf16 to vector<16x128xbf16>
    %4 = vector.extract_strided_slice %1 {offsets = [0, 0], sizes = [16, 1], strides = [1, 1]} : vector<16x4xi32> to vector<16x1xi32>
    %5 = vector.broadcast %4 : vector<16x1xi32> to vector<16x128xi32>
    %6 = arith.cmpi eq, %2, %5 : vector<16x128xi32>
    %7 = arith.select %6, %3, %0 : vector<16x128xi1>, vector<16x128xbf16>
    %8 = vector.extract_strided_slice %1 {offsets = [0, 1], sizes = [16, 1], strides = [1, 1]} : vector<16x4xi32> to vector<16x1xi32>
    %9 = vector.broadcast %8 : vector<16x1xi32> to vector<16x128xi32>
    %10 = arith.cmpi eq, %2, %9 : vector<16x128xi32>
    %11 = arith.select %10, %3, %7 : vector<16x128xi1>, vector<16x128xbf16>
    %12 = vector.extract_strided_slice %1 {offsets = [0, 2], sizes = [16, 1], strides = [1, 1]} : vector<16x4xi32> to vector<16x1xi32>
    %13 = vector.broadcast %12 : vector<16x1xi32> to vector<16x128xi32>
    %14 = arith.cmpi eq, %2, %13 : vector<16x128xi32>
    %15 = arith.select %14, %3, %11 : vector<16x128xi1>, vector<16x128xbf16>
    %16 = vector.extract_strided_slice %1 {offsets = [0, 3], sizes = [16, 1], strides = [1, 1]} : vector<16x4xi32> to vector<16x1xi32>
    %17 = vector.broadcast %16 : vector<16x1xi32> to vector<16x128xi32>
    %18 = arith.cmpi eq, %2, %17 : vector<16x128xi32>
    %19 = arith.select %18, %3, %15 : vector<16x128xi1>, vector<16x128xbf16>
    %c0_3 = arith.constant 0 : index
    %c0_4 = arith.constant 0 : index
    %20 = vector.load %arg4[%c0_3, %c0_4] : memref<128x128xbf16, #tpu.memory_space<vmem>>, vector<128x128xbf16>
    %cst_5 = arith.constant dense<0.000000e+00> : vector<16x128xf32>
    %21 = tpu.matmul %19, %20, %cst_5 {dimension_numbers = #tpu.dot_dimension_numbers<[1], [0], [0], [1], [0, 0, 1, 1], [], []>} : vector<16x128xbf16>, vector<128x128xbf16>, vector<16x128xf32> -> vector<16x128xf32>
    %c0_6 = arith.constant 0 : index
    %c0_7 = arith.constant 0 : index
    %22 = vector.load %arg3[%c0_6, %c0_7] : memref<16x1024xbf16, #tpu.memory_space<vmem>>, vector<16x1024xbf16>
    %c0_8 = arith.constant 0 : index
    %c0_9 = arith.constant 0 : index
    %23 = vector.load %arg5[%c0_8, %c0_9] : memref<1024x128xbf16, #tpu.memory_space<vmem>>, vector<1024x128xbf16>
    %cst_10 = arith.constant dense<0.000000e+00> : vector<16x128xf32>
    %24 = tpu.matmul %22, %23, %cst_10 {dimension_numbers = #tpu.dot_dimension_numbers<[1], [0], [0], [1], [0, 0, 1, 1], [], []>} : vector<16x1024xbf16>, vector<1024x128xbf16>, vector<16x128xf32> -> vector<16x128xf32>
    %25 = arith.addf %21, %24 : vector<16x128xf32>
    %c0_11 = arith.constant 0 : index
    %c0_12 = arith.constant 0 : index
    %26 = vector.load %arg6[%c0_11, %c0_12] : memref<1x128xf32, #tpu.memory_space<vmem>>, vector<1x128xf32>
    %27 = vector.broadcast %26 : vector<1x128xf32> to vector<16x128xf32>
    %28 = arith.addf %25, %27 : vector<16x128xf32>
    %cst_13 = arith.constant 0.000000e+00 : f32
    %29 = vector.broadcast %cst_13 : f32 to vector<16x128xf32>
    %30 = arith.maximumf %28, %29 : vector<16x128xf32>
    %31 = arith.truncf %30 : vector<16x128xf32> to vector<16x128xbf16>
    %c0_14 = arith.constant 0 : index
    %c0_15 = arith.constant 0 : index
    %32 = vector.load %arg7[%c0_14, %c0_15] : memref<128x128xbf16, #tpu.memory_space<vmem>>, vector<128x128xbf16>
    %cst_16 = arith.constant dense<0.000000e+00> : vector<16x128xf32>
    %33 = tpu.matmul %31, %32, %cst_16 {dimension_numbers = #tpu.dot_dimension_numbers<[1], [0], [0], [1], [0, 0, 1, 1], [], []>} : vector<16x128xbf16>, vector<128x128xbf16>, vector<16x128xf32> -> vector<16x128xf32>
    %c0_17 = arith.constant 0 : index
    %c0_18 = arith.constant 0 : index
    %34 = vector.load %arg8[%c0_17, %c0_18] : memref<1x128xf32, #tpu.memory_space<vmem>>, vector<1x128xf32>
    %35 = vector.broadcast %34 : vector<1x128xf32> to vector<16x128xf32>
    %36 = arith.addf %33, %35 : vector<16x128xf32>
    %37 = arith.truncf %36 : vector<16x128xf32> to vector<16x128xbf16>
    %c0_19 = arith.constant 0 : index
    %c0_20 = arith.constant 0 : index
    %38 = vector.load %arg9[%c0_19, %c0_20] : memref<16x128xbf16, #tpu.memory_space<vmem>>, vector<16x128xbf16>
    tpu.vector_store %arg9[%c0_19, %c0_20], %37 {strides = array<i32>} : memref<16x128xbf16, #tpu.memory_space<vmem>>, vector<16x128xbf16>,
    return
  }
  func.func @transform_0(%arg0: i32) -> (i32, i32) {
    %c0_i32 = arith.constant 0 : i32
    %c0_i32_0 = arith.constant 0 : i32
    return %arg0, %c0_i32 : i32, i32
  }
  func.func @transform_1(%arg0: i32) -> (i32, i32) {
    %c0_i32 = arith.constant 0 : i32
    %c0_i32_0 = arith.constant 0 : i32
    return %arg0, %c0_i32 : i32, i32
  }
  func.func @transform_2(%arg0: i32) -> (i32, i32) {
    %c0_i32 = arith.constant 0 : i32
    %c0_i32_0 = arith.constant 0 : i32
    return %arg0, %c0_i32 : i32, i32
  }
  func.func @transform_3(%arg0: i32) -> (i32, i32) {
    %c0_i32 = arith.constant 0 : i32
    %c0_i32_0 = arith.constant 0 : i32
    %c0_i32_1 = arith.constant 0 : i32
    return %c0_i32, %c0_i32_0 : i32, i32
  }
  func.func @transform_4(%arg0: i32) -> (i32, i32) {
    %c0_i32 = arith.constant 0 : i32
    %c0_i32_0 = arith.constant 0 : i32
    %c0_i32_1 = arith.constant 0 : i32
    return %c0_i32, %c0_i32_0 : i32, i32
  }
  func.func @transform_5(%arg0: i32) -> (i32, i32) {
    %c0_i32 = arith.constant 0 : i32
    %c0_i32_0 = arith.constant 0 : i32
    %c0_i32_1 = arith.constant 0 : i32
    return %c0_i32, %c0_i32_0 : i32, i32
  }
  func.func @transform_6(%arg0: i32) -> (i32, i32) {
    %c0_i32 = arith.constant 0 : i32
    %c0_i32_0 = arith.constant 0 : i32
    %c0_i32_1 = arith.constant 0 : i32
    return %c0_i32, %c0_i32_0 : i32, i32
  }
  func.func @transform_7(%arg0: i32) -> (i32, i32) {
    %c0_i32 = arith.constant 0 : i32
    %c0_i32_0 = arith.constant 0 : i32
    %c0_i32_1 = arith.constant 0 : i32
    return %c0_i32, %c0_i32_0 : i32, i32
  }
  func.func @transform_8(%arg0: i32) -> (i32, i32) {
    %c0_i32 = arith.constant 0 : i32
    %c0_i32_0 = arith.constant 0 : i32
    return %arg0, %c0_i32 : i32, i32
  }
}

module attributes {stable_mosaic.version = 11 : i64} {
  func.func @_covet_mlp_kernel(%arg0: i32, %arg1: memref<16x128xbf16, #tpu.memory_space<vmem>>, %arg2: memref<16x4xi32, #tpu.memory_space<vmem>>, %arg3: memref<16x1024xbf16, #tpu.memory_space<vmem>>, %arg4: memref<128x128xbf16, #tpu.memory_space<vmem>>, %arg5: memref<1024x128xbf16, #tpu.memory_space<vmem>>, %arg6: memref<1x128xf32, #tpu.memory_space<vmem>>, %arg7: memref<128x128xbf16, #tpu.memory_space<vmem>>, %arg8: memref<1x128xf32, #tpu.memory_space<vmem>>, %arg9: memref<16x128xbf16, #tpu.memory_space<vmem>>) attributes {dimension_semantics = [#tpu.dimension_semantics<parallel>], iteration_bounds = array<i64: 2>, scalar_prefetch = 0 : i64, scratch_operands = 0 : i64, tpu.core_type = #tpu.core_type<tc>, window_params = [{transform_indices = @transform_0, window_bounds = array<i64: 16, 128>}, {transform_indices = @transform_1, window_bounds = array<i64: 16, 4>}, {transform_indices = @transform_2, window_bounds = array<i64: 16, 1024>}, {pipeline_mode = #tpu.pipeline_mode<synchronous>, transform_indices = @transform_3, window_bounds = array<i64: 128, 128>}, {pipeline_mode = #tpu.pipeline_mode<synchronous>, transform_indices = @transform_4, window_bounds = array<i64: 1024, 128>}, {pipeline_mode = #tpu.pipeline_mode<synchronous>, transform_indices = @transform_5, window_bounds = array<i64: 1, 128>}, {pipeline_mode = #tpu.pipeline_mode<synchronous>, transform_indices = @transform_6, window_bounds = array<i64: 128, 128>}, {pipeline_mode = #tpu.pipeline_mode<synchronous>, transform_indices = @transform_7, window_bounds = array<i64: 1, 128>}, {transform_indices = @transform_8, window_bounds = array<i64: 16, 128>}]} {
    %c0 = arith.constant 0 : index
    %c0_0 = arith.constant 0 : index
    %0 = vector.load %arg1[%c0, %c0_0] : memref<16x128xbf16, #tpu.memory_space<vmem>>, vector<16x128xbf16>
    %c0_1 = arith.constant 0 : index
    %c0_2 = arith.constant 0 : index
    %1 = vector.load %arg2[%c0_1, %c0_2] : memref<16x4xi32, #tpu.memory_space<vmem>>, vector<16x4xi32>
    %2 = tpu.iota {dimensions = array<i32: 1>} : vector<16x128xi32>
    %cst = arith.constant 0.000000e+00 : bf16
    %3 = vector.broadcast %cst : bf16 to vector<16x128xbf16>
    %4 = vector.extract_strided_slice %1 {offsets = [0, 0], sizes = [16, 1], strides = [1, 1]} : vector<16x4xi32> to vector<16x1xi32>
    %5 = vector.broadcast %4 : vector<16x1xi32> to vector<16x128xi32>
    %6 = arith.cmpi eq, %2, %5 : vector<16x128xi32>
    %7 = arith.select %6, %3, %0 : vector<16x128xi1>, vector<16x128xbf16>
    %8 = vector.extract_strided_slice %1 {offsets = [0, 1], sizes = [16, 1], strides = [1, 1]} : vector<16x4xi32> to vector<16x1xi32>
    %9 = vector.broadcast %8 : vector<16x1xi32> to vector<16x128xi32>
    %10 = arith.cmpi eq, %2, %9 : vector<16x128xi32>
    %11 = arith.select %10, %3, %7 : vector<16x128xi1>, vector<16x128xbf16>
    %12 = vector.extract_strided_slice %1 {offsets = [0, 2], sizes = [16, 1], strides = [1, 1]} : vector<16x4xi32> to vector<16x1xi32>
    %13 = vector.broadcast %12 : vector<16x1xi32> to vector<16x128xi32>
    %14 = arith.cmpi eq, %2, %13 : vector<16x128xi32>
    %15 = arith.select %14, %3, %11 : vector<16x128xi1>, vector<16x128xbf16>
    %16 = vector.extract_strided_slice %1 {offsets = [0, 3], sizes = [16, 1], strides = [1, 1]} : vector<16x4xi32> to vector<16x1xi32>
    %17 = vector.broadcast %16 : vector<16x1xi32> to vector<16x128xi32>
    %18 = arith.cmpi eq, %2, %17 : vector<16x128xi32>
    %19 = arith.select %18, %3, %15 : vector<16x128xi1>, vector<16x128xbf16>
    %c0_3 = arith.constant 0 : index
    %c0_4 = arith.constant 0 : index
    %20 = vector.load %arg4[%c0_3, %c0_4] : memref<128x128xbf16, #tpu.memory_space<vmem>>, vector<128x128xbf16>
    %cst_5 = arith.constant dense<0.000000e+00> : vector<16x128xf32>
    %21 = tpu.matmul %19, %20, %cst_5 {dimension_numbers = #tpu.dot_dimension_numbers<[1], [0], [0], [1], [0, 0, 1, 1], [], []>} : vector<16x128xbf16>, vector<128x128xbf16>, vector<16x128xf32> -> vector<16x128xf32>
    %c0_6 = arith.constant 0 : index
    %c0_7 = arith.constant 0 : index
    %22 = vector.load %arg3[%c0_6, %c0_7] : memref<16x1024xbf16, #tpu.memory_space<vmem>>, vector<16x1024xbf16>
    %c0_8 = arith.constant 0 : index
    %c0_9 = arith.constant 0 : index
    %23 = vector.load %arg5[%c0_8, %c0_9] : memref<1024x128xbf16, #tpu.memory_space<vmem>>, vector<1024x128xbf16>
    %cst_10 = arith.constant dense<0.000000e+00> : vector<16x128xf32>
    %24 = tpu.matmul %22, %23, %cst_10 {dimension_numbers = #tpu.dot_dimension_numbers<[1], [0], [0], [1], [0, 0, 1, 1], [], []>} : vector<16x1024xbf16>, vector<1024x128xbf16>, vector<16x128xf32> -> vector<16x128xf32>
    %25 = arith.addf %21, %24 : vector<16x128xf32>
    %c0_11 = arith.constant 0 : index
    %c0_12 = arith.constant 0 : index
    %26 = vector.load %arg6[%c0_11, %c0_12] : memref<1x128xf32, #tpu.memory_space<vmem>>, vector<1x128xf32>
    %27 = vector.broadcast %26 : vector<1x128xf32> to vector<16x128xf32>
    %28 = arith.addf %25, %27 : vector<16x128xf32>
    %cst_13 = arith.constant 0.000000e+00 : f32
    %29 = vector.broadcast %cst_13 : f32 to vector<16x128xf32>
    %30 = arith.maximumf %28, %29 : vector<16x128xf32>
    %31 = arith.truncf %30 : vector<16x128xf32> to vector<16x128xbf16>
    %c0_14 = arith.constant 0 : index
    %c0_15 = arith.constant 0 : index
    %32 = vector.load %arg7[%c0_14, %c0_15] : memref<128x128xbf16, #tpu.memory_space<vmem>>, vector<128x128xbf16>
    %cst_16 = arith.constant dense<0.000000e+00> : vector<16x128xf32>
    %33 = tpu.matmul %31, %32, %cst_16 {dimension_numbers = #tpu.dot_dimension_numbers<[1], [0], [0], [1], [0, 0, 1, 1], [], []>} : vector<16x128xbf16>, vector<128x128xbf16>, vector<16x128xf32> -> vector<16x128xf32>
    %c0_17 = arith.constant 0 : index
    %c0_18 = arith.constant 0 : index
    %34 = vector.load %arg8[%c0_17, %c0_18] : memref<1x128xf32, #tpu.memory_space<vmem>>, vector<1x128xf32>
    %35 = vector.broadcast %34 : vector<1x128xf32> to vector<16x128xf32>
    %36 = arith.addf %33, %35 : vector<16x128xf32>
    %37 = arith.truncf %36 : vector<16x128xf32> to vector<16x128xbf16>
    %c0_19 = arith.constant 0 : index
    %c0_20 = arith.constant 0 : index
    %38 = vector.load %arg9[%c0_19, %c0_20] : memref<16x128xbf16, #tpu.memory_space<vmem>>, vector<16x128xbf16>
    tpu.vector_store %arg9[%c0_19, %c0_20], %37 {strides = array<i32>} : memref<16x128xbf16, #tpu.memory_space<vmem>>, vector<16x128xbf16>,
    return
  }
  func.func @transform_0(%arg0: i32) -> (i32, i32) {
    %c0_i32 = arith.constant 0 : i32
    %c0_i32_0 = arith.constant 0 : i32
    return %arg0, %c0_i32 : i32, i32
  }
  func.func @transform_1(%arg0: i32) -> (i32, i32) {
    %c0_i32 = arith.constant 0 : i32
    %c0_i32_0 = arith.constant 0 : i32
    return %arg0, %c0_i32 : i32, i32
  }
  func.func @transform_2(%arg0: i32) -> (i32, i32) {
    %c0_i32 = arith.constant 0 : i32
    %c0_i32_0 = arith.constant 0 : i32
    return %arg0, %c0_i32 : i32, i32
  }
  func.func @transform_3(%arg0: i32) -> (i32, i32) {
    %c0_i32 = arith.constant 0 : i32
    %c0_i32_0 = arith.constant 0 : i32
    %c0_i32_1 = arith.constant 0 : i32
    return %c0_i32, %c0_i32_0 : i32, i32
  }
  func.func @transform_4(%arg0: i32) -> (i32, i32) {
    %c0_i32 = arith.constant 0 : i32
    %c0_i32_0 = arith.constant 0 : i32
    %c0_i32_1 = arith.constant 0 : i32
    return %c0_i32, %c0_i32_0 : i32, i32
  }
  func.func @transform_5(%arg0: i32) -> (i32, i32) {
    %c0_i32 = arith.constant 0 : i32
    %c0_i32_0 = arith.constant 0 : i32
    %c0_i32_1 = arith.constant 0 : i32
    return %c0_i32, %c0_i32_0 : i32, i32
  }
  func.func @transform_6(%arg0: i32) -> (i32, i32) {
    %c0_i32 = arith.constant 0 : i32
    %c0_i32_0 = arith.constant 0 : i32
    %c0_i32_1 = arith.constant 0 : i32
    return %c0_i32, %c0_i32_0 : i32, i32
  }
  func.func @transform_7(%arg0: i32) -> (i32, i32) {
    %c0_i32 = arith.constant 0 : i32
    %c0_i32_0 = arith.constant 0 : i32
    %c0_i32_1 = arith.constant 0 : i32
    return %c0_i32, %c0_i32_0 : i32, i32
  }
  func.func @transform_8(%arg0: i32) -> (i32, i32) {
    %c0_i32 = arith.constant 0 : i32
    %c0_i32_0 = arith.constant 0 : i32
    return %arg0, %c0_i32 : i32, i32
  }
}

</mosaic_0001>

<llo_original>
// kernel: tpu_custom_call.1
$region0: #{tpu_custom_call.1}
  #allocation0 [shape = 'u32[]', space=smem, size = 0x4, offset = 0x4, fixed_abs, tag = 'smem constant byte address 0x4 - core index']
  #allocation1 [shape = 'u32[144,128]{1,0:T(1,128)}', space=vmem, size = 0x12000, scoped, tag = 'internal scratch']
  %s0 = inlined_call_operand.vmem [shape: bf16[32,128], index: 0, kind: input, shape index: {}]
  %s1 = inlined_call_operand.vmem [shape: s32[32,4], index: 1, kind: input, shape index: {}]
  %s2 = inlined_call_operand.hbm [shape: bf16[32,1024], index: 2, kind: input, shape index: {}]
  %s3 = inlined_call_operand.hbm [shape: bf16[128,128], index: 3, kind: input, shape index: {}]
  %s4 = inlined_call_operand.hbm [shape: bf16[1024,128], index: 4, kind: input, shape index: {}]
  %s5 = inlined_call_operand.vmem [shape: f32[1,128], index: 5, kind: input, shape index: {}]
  %s6 = inlined_call_operand.hbm [shape: bf16[128,128], index: 6, kind: input, shape index: {}]
  %s7 = inlined_call_operand.vmem [shape: f32[1,128], index: 7, kind: input, shape index: {}]
  %s8 = inlined_call_operand.hbm [shape: bf16[32,128], index: 8, kind: output, shape index: {}]
  %s9 = sld [smem:[#allocation0]]
  $region81: #{tpu_custom_call.1} parent=0
    _
  %s11 = ssub.s32 1, %s9
  %s12 = scalar_select 0, %s11, %s9
  $region1: #{tpu_custom_call.1} parent=0
    #allocation2 [shape = 'u8[65536]{0}', space=vmem, size = 0x10000, scoped, tag = 'input window, operand 2']
    #allocation3 [shape = 's32[2]{0}', space=sflag, size = 0x8, scoped, tag = 'scoped memory for tpu_custom_call.1']
    #allocation4 [shape = 's32[2]{0}', space=sflag, size = 0x8, scoped, tag = 'scoped memory for tpu_custom_call.1']
    #allocation5 [shape = 'u8[32768]{0}', space=vmem, size = 0x8000, scoped, tag = 'input window, operand 3, single buffered']
    #allocation6 [shape = 's32[1]{0}', space=sflag, size = 0x4, scoped, tag = 'scoped memory for tpu_custom_call.1']
    #allocation7 [shape = 'u8[262144]{0}', space=vmem, size = 0x40000, scoped, tag = 'input window, operand 4, single buffered']
    #allocation8 [shape = 'u8[32768]{0}', space=vmem, size = 0x8000, scoped, tag = 'input window, operand 6, single buffered']
    #allocation9 [shape = 's32[1]{0}', space=sflag, size = 0x4, scoped, tag = 'scoped memory for tpu_custom_call.1']
    #allocation10 [shape = 'u8[8192]{0}', space=vmem, size = 0x2000, scoped, tag = 'output window, operand 0']
    %13 = vsyncpa [#allocation3], 0
    %s14 = scalar_lea.sflag [#allocation3], 1
    %15 = vsyncpa %s14, 0
    %16 = vsyncpa [#allocation6], 0
    %17 = vsyncpa [#allocation9], 0
    %18 = vsyncpa [#allocation4], 0
    %s19 = scalar_lea.sflag [#allocation4], 1
    %20 = vsyncpa %s19, 0
    loop: start=0, step=1, limit=4
    $region2: #{tpu_custom_call.1} parent=1 // loop_pre_header
      _
    $region3: #{tpu_custom_call.1} parent=1 // loop_header
      %s22 = sphi 0, %s26
      %p23 = scmp.ge.s32.totalorder %s22, 4
      %s32 = sphi 0, %s34
      %s35 = sphi 0, %s32
      %s36 = sphi 0, %s35
      %s52 = sphi 0, %s36
      %s58 = sphi 0, %s60
      %s61 = sphi 0, %s58
      %s62 = sphi 0, %s61
      %s78 = sphi 0, %s62
      %s84 = sphi 0, %s86
      %s87 = sphi 0, %s84
      %s88 = sphi 0, %s87
      %s104 = sphi 0, %s88
      %s108 = sphi 0, %s108
      %s110 = sphi 0, %s108
      %s111 = sphi 0, %s110
      %s125 = sphi 0, %s111
      %s129 = sphi 0, %s129
      %s131 = sphi 0, %s129
      %s132 = sphi 0, %s131
      %s146 = sphi 0, %s132
      %s150 = sphi 0, %s150
      %s152 = sphi 0, %s150
      %s153 = sphi 0, %s152
      %s167 = sphi 0, %s153
      %s171 = sphi 0, %s171
      %s173 = sphi 0, %s171
      %s174 = sphi 0, %s173
      %s188 = sphi 0, %s174
      %s192 = sphi 0, %s192
      %s194 = sphi 0, %s192
      %s195 = sphi 0, %s194
      %s209 = sphi 0, %s195
      %s215 = sphi 0, %s217
      %s218 = sphi 0, %s215
      %s219 = sphi 0, %s218
      %s235 = sphi 0, %s219
    $region4: #{tpu_custom_call.1} parent=1 // loop_header_branch
      %25 = sbr.rel (%p23) target = $region8
    $region5: #{tpu_custom_call.1} parent=1 // loop_body
      %s27 = ssub.s32 %s22, 1
      %s28 = ssub.s32 %s22, 2
      %s29 = sadd.s32 %s22, 1
      %s30 = ssub.s32 %s22, %s29
      %p31 = scmp.eq.s32.totalorder %s30, 0
      %s33 = sadd.s32 %s32, 1
      %s34 = scalar_select %p31, %s32, %s33
      %p37 = pneg %p31
      %p38 = scmp.eq.s32.totalorder %s22, 1
      %p39 = por %p37, %p38
      %p40 = scmp.ne.s32.totalorder %s32, %s35
      %p41 = scmp.eq.s32.totalorder %s22, 0
      %p42 = por %p40, %p41
      %p43 = scmp.ne.s32.totalorder %s32, %s35
      %p44 = scmp.eq.s32.totalorder %s27, 1
      %p45 = por %p43, %p44
      %p46 = scmp.ne.s32.totalorder %s35, %s36
      %p47 = scmp.eq.s32.totalorder %s27, 0
      %p48 = por %p46, %p47
      %p49 = scmp.ne.s32.totalorder %s35, %s36
      %p50 = scmp.eq.s32.totalorder %s28, 1
      %p51 = por %p49, %p50
      %p53 = scmp.ne.s32.totalorder %s36, %s52
      %p54 = scmp.eq.s32.totalorder %s28, 0
      %p55 = por %p53, %p54
      %s56 = ssub.s32 %s22, %s29
      %p57 = scmp.eq.s32.totalorder %s56, 0
      %s59 = sadd.s32 %s58, 1
      %s60 = scalar_select %p57, %s58, %s59
      %p63 = pneg %p57
      %p64 = scmp.eq.s32.totalorder %s22, 1
      %p65 = por %p63, %p64
      %p66 = scmp.ne.s32.totalorder %s58, %s61
      %p67 = scmp.eq.s32.totalorder %s22, 0
      %p68 = por %p66, %p67
      %p69 = scmp.ne.s32.totalorder %s58, %s61
      %p70 = scmp.eq.s32.totalorder %s27, 1
      %p71 = por %p69, %p70
      %p72 = scmp.ne.s32.totalorder %s61, %s62
      %p73 = scmp.eq.s32.totalorder %s27, 0
      %p74 = por %p72, %p73
      %p75 = scmp.ne.s32.totalorder %s61, %s62
      %p76 = scmp.eq.s32.totalorder %s28, 1
      %p77 = por %p75, %p76
      %p79 = scmp.ne.s32.totalorder %s62, %s78
      %p80 = scmp.eq.s32.totalorder %s28, 0
      %p81 = por %p79, %p80
      %s82 = ssub.s32 %s22, %s29
      %p83 = scmp.eq.s32.totalorder %s82, 0
      %s85 = sadd.s32 %s84, 1
      %s86 = scalar_select %p83, %s84, %s85
      %p89 = pneg %p83
      %p90 = scmp.eq.s32.totalorder %s22, 1
      %p91 = por %p89, %p90
      %p92 = scmp.ne.s32.totalorder %s84, %s87
      %p93 = scmp.eq.s32.totalorder %s22, 0
      %p94 = por %p92, %p93
      %p95 = scmp.ne.s32.totalorder %s84, %s87
      %p96 = scmp.eq.s32.totalorder %s27, 1
      %p97 = por %p95, %p96
      %p98 = scmp.ne.s32.totalorder %s87, %s88
      %p99 = scmp.eq.s32.totalorder %s27, 0
      %p100 = por %p98, %p99
      %p101 = scmp.ne.s32.totalorder %s87, %s88
      %p102 = scmp.eq.s32.totalorder %s28, 1
      %p103 = por %p101, %p102
      %p105 = scmp.ne.s32.totalorder %s88, %s104
      %p106 = scmp.eq.s32.totalorder %s28, 0
      %p107 = por %p105, %p106
      %s109 = sadd.s32 %s108, 1
      %p112 = scmp.eq.s32.totalorder %s22, 1
      %p113 = scmp.ne.s32.totalorder %s108, %s110
      %p114 = scmp.eq.s32.totalorder %s22, 0
      %p115 = por %p113, %p114
      %p116 = scmp.ne.s32.totalorder %s108, %s110
      %p117 = scmp.eq.s32.totalorder %s27, 1
      %p118 = por %p116, %p117
      %p119 = scmp.ne.s32.totalorder %s110, %s111
      %p120 = scmp.eq.s32.totalorder %s27, 0
      %p121 = por %p119, %p120
      %p122 = scmp.ne.s32.totalorder %s110, %s111
      %p123 = scmp.eq.s32.totalorder %s28, 1
      %p124 = por %p122, %p123
      %p126 = scmp.ne.s32.totalorder %s111, %s125
      %p127 = scmp.eq.s32.totalorder %s28, 0
      %p128 = por %p126, %p127
      %s130 = sadd.s32 %s129, 1
      %p133 = scmp.eq.s32.totalorder %s22, 1
      %p134 = scmp.ne.s32.totalorder %s129, %s131
      %p135 = scmp.eq.s32.totalorder %s22, 0
      %p136 = por %p134, %p135
      %p137 = scmp.ne.s32.totalorder %s129, %s131
      %p138 = scmp.eq.s32.totalorder %s27, 1
      %p139 = por %p137, %p138
      %p140 = scmp.ne.s32.totalorder %s131, %s132
      %p141 = scmp.eq.s32.totalorder %s27, 0
      %p142 = por %p140, %p141
      %p143 = scmp.ne.s32.totalorder %s131, %s132
      %p144 = scmp.eq.s32.totalorder %s28, 1
      %p145 = por %p143, %p144
      %p147 = scmp.ne.s32.totalorder %s132, %s146
      %p148 = scmp.eq.s32.totalorder %s28, 0
      %p149 = por %p147, %p148
      %s151 = sadd.s32 %s150, 1
      %p154 = scmp.eq.s32.totalorder %s22, 1
      %p155 = scmp.ne.s32.totalorder %s150, %s152
      %p156 = scmp.eq.s32.totalorder %s22, 0
      %p157 = por %p155, %p156
      %p158 = scmp.ne.s32.totalorder %s150, %s152
      %p159 = scmp.eq.s32.totalorder %s27, 1
      %p160 = por %p158, %p159
      %p161 = scmp.ne.s32.totalorder %s152, %s153
      %p162 = scmp.eq.s32.totalorder %s27, 0
      %p163 = por %p161, %p162
      %p164 = scmp.ne.s32.totalorder %s152, %s153
      %p165 = scmp.eq.s32.totalorder %s28, 1
      %p166 = por %p164, %p165
      %p168 = scmp.ne.s32.totalorder %s153, %s167
      %p169 = scmp.eq.s32.totalorder %s28, 0
      %p170 = por %p168, %p169
      %s172 = sadd.s32 %s171, 1
      %p175 = scmp.eq.s32.totalorder %s22, 1
      %p176 = scmp.ne.s32.totalorder %s171, %s173
      %p177 = scmp.eq.s32.totalorder %s22, 0
      %p178 = por %p176, %p177
      %p179 = scmp.ne.s32.totalorder %s171, %s173
      %p180 = scmp.eq.s32.totalorder %s27, 1
      %p181 = por %p179, %p180
      %p182 = scmp.ne.s32.totalorder %s173, %s174
      %p183 = scmp.eq.s32.totalorder %s27, 0
      %p184 = por %p182, %p183
      %p185 = scmp.ne.s32.totalorder %s173, %s174
      %p186 = scmp.eq.s32.totalorder %s28, 1
      %p187 = por %p185, %p186
      %p189 = scmp.ne.s32.totalorder %s174, %s188
      %p190 = scmp.eq.s32.totalorder %s28, 0
      %p191 = por %p189, %p190
      %s193 = sadd.s32 %s192, 1
      %p196 = scmp.eq.s32.totalorder %s22, 1
      %p197 = scmp.ne.s32.totalorder %s192, %s194
      %p198 = scmp.eq.s32.totalorder %s22, 0
      %p199 = por %p197, %p198
      %p200 = scmp.ne.s32.totalorder %s192, %s194
      %p201 = scmp.eq.s32.totalorder %s27, 1
      %p202 = por %p200, %p201
      %p203 = scmp.ne.s32.totalorder %s194, %s195
      %p204 = scmp.eq.s32.totalorder %s27, 0
      %p205 = por %p203, %p204
      %p206 = scmp.ne.s32.totalorder %s194, %s195
      %p207 = scmp.eq.s32.totalorder %s28, 1
      %p208 = por %p206, %p207
      %p210 = scmp.ne.s32.totalorder %s195, %s209
      %p211 = scmp.eq.s32.totalorder %s28, 0
      %p212 = por %p210, %p211
      %s213 = ssub.s32 %s22, %s29
      %p214 = scmp.eq.s32.totalorder %s213, 0
      %s216 = sadd.s32 %s215, 1
      %s217 = scalar_select %p214, %s215, %s216
      %p220 = pneg %p214
      %p221 = scmp.eq.s32.totalorder %s22, 1
      %p222 = por %p220, %p221
      %p223 = scmp.ne.s32.totalorder %s215, %s218
      %p224 = scmp.eq.s32.totalorder %s22, 0
      %p225 = por %p223, %p224
      %p226 = scmp.ne.s32.totalorder %s215, %s218
      %p227 = scmp.eq.s32.totalorder %s27, 1
      %p228 = por %p226, %p227
      %p229 = scmp.ne.s32.totalorder %s218, %s219
      %p230 = scmp.eq.s32.totalorder %s27, 0
      %p231 = por %p229, %p230
      %p232 = scmp.ne.s32.totalorder %s218, %s219
      %p233 = scmp.eq.s32.totalorder %s28, 1
      %p234 = por %p232, %p233
      %p236 = scmp.ne.s32.totalorder %s219, %s235
      %p237 = scmp.eq.s32.totalorder %s28, 0
      %p238 = por %p236, %p237
      %p239 = scmp.le.s32.totalorder 1, %s22
      %p240 = scmp.lt.s32.totalorder %s22, 3
      %p241 = pnand %p239, %p240
      %p242 = pneg %p241
      // Predicated region
      $region9: #{tpu_custom_call.1} parent=5 // pred_check
        _
      $region10: #{tpu_custom_call.1} parent=5 // pred_check_branch
        %244 = sbr.rel (%p241) target = $region12
      $region11: #{tpu_custom_call.1} parent=5 // pred_region
        %s245 = ssub.s32 %s22, 1
        // Predicated region
        $region13: #{tpu_custom_call.1} parent=11 // pred_check
          %p246 = pneg %p121
        $region14: #{tpu_custom_call.1} parent=11 // pred_check_branch
          %248 = sbr.rel (%p246) target = $region16
        $region15: #{tpu_custom_call.1} parent=11 // pred_region
          %s250 = ssub.s32 1024, 1024
          %251 = vsyncadd [#allocation6], %s250
          %s252 = sshll.u32 [#allocation5], 4
          %s253 = int_to_ptr.vmem [resolvable:$true] %s252
          %258 = dma.hbm_to_vmem [thread:$0]  %s3, 1024, %s253, [#allocation6], 64, 64, 4
        $region16: #{tpu_custom_call.1} parent=11 // pred_fallthru
          _
        // Predicated region
        $region17: #{tpu_custom_call.1} parent=11 // pred_check
          %p259 = pneg %p142
        $region18: #{tpu_custom_call.1} parent=11 // pred_check_branch
          %261 = sbr.rel (%p259) target = $region20
        $region19: #{tpu_custom_call.1} parent=11 // pred_region
          %s263 = ssub.s32 8192, 8192
          %264 = vsyncadd [#allocation6], %s263
          %s265 = sshll.u32 [#allocation7], 4
          %s266 = int_to_ptr.vmem [resolvable:$true] %s265
          %271 = dma.hbm_to_vmem [thread:$0]  %s4, 8192, %s266, [#allocation6], 64, 64, 4
        $region20: #{tpu_custom_call.1} parent=11 // pred_fallthru
          _
        // Predicated region
        $region21: #{tpu_custom_call.1} parent=11 // pred_check
          %p272 = pneg %p163
        $region22: #{tpu_custom_call.1} parent=11 // pred_check_branch
          %274 = sbr.rel (%p272) target = $region24
        $region23: #{tpu_custom_call.1} parent=11 // pred_region
          _
        $region24: #{tpu_custom_call.1} parent=11 // pred_fallthru
          _
        // Predicated region
        $region25: #{tpu_custom_call.1} parent=11 // pred_check
          %p275 = pneg %p184
        $region26: #{tpu_custom_call.1} parent=11 // pred_check_branch
          %277 = sbr.rel (%p275) target = $region28
        $region27: #{tpu_custom_call.1} parent=11 // pred_region
          %s279 = ssub.s32 1024, 1024
          %280 = vsyncadd [#allocation9], %s279
          %s281 = sshll.u32 [#allocation8], 4
          %s282 = int_to_ptr.vmem [resolvable:$true] %s281
          %287 = dma.hbm_to_vmem [thread:$0]  %s6, 1024, %s282, [#allocation9], 64, 64, 4
        $region28: #{tpu_custom_call.1} parent=11 // pred_fallthru
          _
        // Predicated region
        $region29: #{tpu_custom_call.1} parent=11 // pred_check
          %p288 = pneg %p205
        $region30: #{tpu_custom_call.1} parent=11 // pred_check_branch
          %290 = sbr.rel (%p288) target = $region32
        $region31: #{tpu_custom_call.1} parent=11 // pred_region
          _
        $region32: #{tpu_custom_call.1} parent=11 // pred_fallthru
          _
      $region12: #{tpu_custom_call.1} parent=5 // pred_fallthru
        _
      %p291 = scmp.lt.s32.totalorder %s22, 2
      // Predicated region
      $region33: #{tpu_custom_call.1} parent=5 // pred_check
        %p292 = pneg %p291
      $region34: #{tpu_custom_call.1} parent=5 // pred_check_branch
        %294 = sbr.rel (%p292) target = $region36
      $region35: #{tpu_custom_call.1} parent=5 // pred_region
        // Predicated region
        $region37: #{tpu_custom_call.1} parent=35 // pred_check
          %p295 = pneg %p42
        $region38: #{tpu_custom_call.1} parent=35 // pred_check_branch
          %297 = sbr.rel (%p295) target = $region40
        $region39: #{tpu_custom_call.1} parent=35 // pred_region
          %s298 = smul.u32 2, %s22
          %p299 = scmp.lt.s32.totalorder %s298, 3
          %s300 = scalar_select %p299, %s298, 3
          %s301 = smul.addr %s300, 4
          %s302 = scalar_lea.vmem %s0, %s301
          %s303 = smul.u32 2, %s22
        $region40: #{tpu_custom_call.1} parent=35 // pred_fallthru
          _
        // Predicated region
        $region41: #{tpu_custom_call.1} parent=35 // pred_check
          %p304 = pneg %p68
        $region42: #{tpu_custom_call.1} parent=35 // pred_check_branch
          %306 = sbr.rel (%p304) target = $region44
        $region43: #{tpu_custom_call.1} parent=35 // pred_region
          %s307 = smul.u32 2, %s22
          %p308 = scmp.lt.s32.totalorder %s307, 3
          %s309 = scalar_select %p308, %s307, 3
          %s310 = smul.addr %s309, 8
          %s311 = scalar_lea.vmem %s1, %s310
          %s312 = smul.u32 2, %s22
        $region44: #{tpu_custom_call.1} parent=35 // pred_fallthru
          _
        // Predicated region
        $region45: #{tpu_custom_call.1} parent=35 // pred_check
          %p313 = pneg %p94
        $region46: #{tpu_custom_call.1} parent=35 // pred_check_branch
          %315 = sbr.rel (%p313) target = $region48
        $region47: #{tpu_custom_call.1} parent=35 // pred_region
          %s316 = sand.u32 %s84, 1
          %s317 = scalar_lea.sflag [#allocation3], %s316
          %s318 = sand.u32 %s84, 1
          %s319 = smul.addr %s318, 64
          %s320 = scalar_lea.vmem [#allocation2], %s319
          %s321 = smul.u32 2, %s22
          %s323 = ssub.s32 1024, 1024
          %324 = vsyncadd %s317, %s323
          %s325 = smul.addr %s321, 8
          %s326 = smul.addr %s325, 64
          %s327 = scalar_lea.hbm %s2, %s326
          %s328 = sshll.u32 %s320, 4
          %s329 = int_to_ptr.vmem [resolvable:$true] %s328
          %334 = dma.hbm_to_vmem [thread:$0]  %s327, 1024, %s329, %s317, 512, 512, 32
        $region48: #{tpu_custom_call.1} parent=35 // pred_fallthru
          _
      $region36: #{tpu_custom_call.1} parent=5 // pred_fallthru
        _
      %p335 = scmp.le.s32.totalorder 1, %s22
      %p336 = scmp.lt.s32.totalorder %s22, 3
      %p337 = pnand %p335, %p336
      %p338 = pneg %p337
      // Predicated region
      $region49: #{tpu_custom_call.1} parent=5 // pred_check
        _
      $region50: #{tpu_custom_call.1} parent=5 // pred_check_branch
        %340 = sbr.rel (%p337) target = $region52
      $region51: #{tpu_custom_call.1} parent=5 // pred_region
        %s341 = ssub.s32 %s22, 1
        %s342 = sand.u32 %s87, 1
        %s343 = scalar_lea.sflag [#allocation3], %s342
        %s344 = sand.u32 %s87, 1
        %s345 = smul.addr %s344, 64
        %s346 = scalar_lea.vmem [#allocation2], %s345
        // Predicated region
        $region53: #{tpu_custom_call.1} parent=51 // pred_check
          %p347 = pneg %p100
        $region54: #{tpu_custom_call.1} parent=51 // pred_check_branch
          %349 = sbr.rel (%p347) target = $region56
        $region55: #{tpu_custom_call.1} parent=51 // pred_region
          %350 = dma.done %s343, 1024
        $region56: #{tpu_custom_call.1} parent=51 // pred_fallthru
          _
        // Predicated region
        $region57: #{tpu_custom_call.1} parent=51 // pred_check
          %p351 = pneg %p121
        $region58: #{tpu_custom_call.1} parent=51 // pred_check_branch
          %353 = sbr.rel (%p351) target = $region60
        $region59: #{tpu_custom_call.1} parent=51 // pred_region
          %354 = dma.done [#allocation6], 1024
        $region60: #{tpu_custom_call.1} parent=51 // pred_fallthru
          _
        // Predicated region
        $region61: #{tpu_custom_call.1} parent=51 // pred_check
          %p355 = pneg %p142
        $region62: #{tpu_custom_call.1} parent=51 // pred_check_branch
          %357 = sbr.rel (%p355) target = $region64
        $region63: #{tpu_custom_call.1} parent=51 // pred_region
          %358 = dma.done [#allocation6], 8192
        $region64: #{tpu_custom_call.1} parent=51 // pred_fallthru
          _
        // Predicated region
        $region65: #{tpu_custom_call.1} parent=51 // pred_check
          %p359 = pneg %p184
        $region66: #{tpu_custom_call.1} parent=51 // pred_check_branch
          %361 = sbr.rel (%p359) target = $region68
        $region67: #{tpu_custom_call.1} parent=51 // pred_region
          %362 = dma.done [#allocation9], 1024
        $region68: #{tpu_custom_call.1} parent=51 // pred_fallthru
          _
        %s363 = smul.u32 2, %s27
        %p364 = scmp.lt.s32.totalorder %s363, 3
        %s365 = scalar_select %p364, %s363, 3
        %s366 = smul.addr %s365, 4
        %s367 = scalar_lea.vmem %s0, %s366
        %p368 = pneg %p48
        %p369 = pneg %p45
        %s370 = smul.u32 2, %s27
        %p371 = scmp.lt.s32.totalorder %s370, 3
        %s372 = scalar_select %p371, %s370, 3
        %s373 = smul.addr %s372, 8
        %s374 = scalar_lea.vmem %s1, %s373
        %p375 = pneg %p74
        %p376 = pneg %p71
        %s377 = sand.u32 %s87, 1
        %s378 = scalar_lea.sflag [#allocation3], %s377
        %s379 = sand.u32 %s87, 1
        %s380 = smul.addr %s379, 64
        %s381 = scalar_lea.vmem [#allocation2], %s380
        %p382 = pneg %p100
        %p383 = pneg %p97
        %p384 = pneg %p121
        %p385 = pneg %p118
        %p386 = pneg %p142
        %p387 = pneg %p139
        %p388 = pneg %p163
        %p389 = pneg %p160
        %p390 = pneg %p184
        %p391 = pneg %p181
        %p392 = pneg %p205
        %p393 = pneg %p202
        %p394 = pneg %p231
        %p395 = pneg %p228
        %s396 = sand.u32 %s218, 1
        %s397 = scalar_lea.sflag [#allocation4], %s396
        %s398 = sand.u32 %s218, 1
        %s399 = smul.addr %s398, 8
        %s400 = scalar_lea.vmem [#allocation10], %s399
        %s401 = smul.u32 2, %s27
        %p402 = scmp.lt.s32.totalorder %s401, 3
        %s403 = scalar_select %p402, %s401, 3
        %s404 = smul.addr %s403, 4
        %s405 = scalar_lea.vmem %s0, %s404
        %s406 = smul.u32 2, %s27
        %s407 = smul.u32 2, %s27
        %p408 = scmp.lt.s32.totalorder %s407, 3
        %s409 = scalar_select %p408, %s407, 3
        %s410 = smul.addr %s409, 8
        %s411 = scalar_lea.vmem %s1, %s410
        %s412 = smul.u32 2, %s27
        %s413 = smul.u32 2, %s27
        %s414 = smul.u32 2, %s27
        %v416 = vld [vmem:[%s405] sm:$0xf]
        %v417 = vld [vmem:[%s405 + $0x4] sm:$0xf]
        %v418 = vld [vmem:[%s411] sm:$0xff]
        %v419 = vld [vmem:[%s411 + $0x8] sm:$0xff]
        %v420 = vlaneseq
        %v421 = vand.u32 %v420, 127
        %422 = vset.pattern.permute.xlu0 0
        %423 = vperm.xlu0 %422, %v418
        %v424 = vpop.permute.xlu0 %423
        %425 = vset.pattern.permute.xlu0 0
        %426 = vperm.xlu0 %425, %v419
        %v427 = vpop.permute.xlu0 %426
        %vm428 = vcmp.eq.s32.totalorder %v421, %v424
        %vm429 = vcmp.eq.s32.totalorder %v421, %v427
        %vm430 = vmpackc.low %vm428, %vm428
        %vm431 = vmpackc.low %vm429, %vm429
        %v432 = vsel %vm430, 0, %v416
        %v433 = vsel %vm431, 0, %v417
        %434 = vset.pattern.permute.xlu0 1
        %435 = vperm.xlu0 %434, %v418
        %v436 = vpop.permute.xlu0 %435
        %437 = vset.pattern.permute.xlu0 1
        %438 = vperm.xlu0 %437, %v419
        %v439 = vpop.permute.xlu0 %438
        %vm440 = vcmp.eq.s32.totalorder %v421, %v436
        %vm441 = vcmp.eq.s32.totalorder %v421, %v439
        %vm442 = vmpackc.low %vm440, %vm440
        %vm443 = vmpackc.low %vm441, %vm441
        %v444 = vsel %vm442, 0, %v432
        %v445 = vsel %vm443, 0, %v433
        %446 = vset.pattern.permute.xlu0 2
        %447 = vperm.xlu0 %446, %v418
        %v448 = vpop.permute.xlu0 %447
        %449 = vset.pattern.permute.xlu0 2
        %450 = vperm.xlu0 %449, %v419
        %v451 = vpop.permute.xlu0 %450
        %vm452 = vcmp.eq.s32.totalorder %v421, %v448
        %vm453 = vcmp.eq.s32.totalorder %v421, %v451
        %vm454 = vmpackc.low %vm452, %vm452
        %vm455 = vmpackc.low %vm453, %vm453
        %v456 = vsel %vm454, 0, %v444
        %v457 = vsel %vm455, 0, %v445
        %458 = vset.pattern.permute.xlu0 3
        %459 = vperm.xlu0 %458, %v418
        %v460 = vpop.permute.xlu0 %459
        %461 = vset.pattern.permute.xlu0 3
        %462 = vperm.xlu0 %461, %v419
        %v463 = vpop.permute.xlu0 %462
        %vm464 = vcmp.eq.s32.totalorder %v421, %v460
        %vm465 = vcmp.eq.s32.totalorder %v421, %v463
        %vm466 = vmpackc.low %vm464, %vm464
        %vm467 = vmpackc.low %vm465, %vm465
        %v468 = vsel %vm466, 0, %v456
        %v469 = vsel %vm467, 0, %v457
        %v470 = vld [vmem:[#allocation5] sm:$0xf]
        %v471 = vld [vmem:[#allocation5 + $0x4] sm:$0xf]
        %v472 = vld [vmem:[#allocation5 + $0x8] sm:$0xf]
        %v473 = vld [vmem:[#allocation5 + $0xc] sm:$0xf]
        %v474 = vld [vmem:[#allocation5 + $0x10] sm:$0xf]
        %v475 = vld [vmem:[#allocation5 + $0x14] sm:$0xf]
        %v476 = vld [vmem:[#allocation5 + $0x18] sm:$0xf]
        %v477 = vld [vmem:[#allocation5 + $0x1c] sm:$0xf]
        %v478 = vld [vmem:[#allocation5 + $0x20] sm:$0xf]
        %v479 = vld [vmem:[#allocation5 + $0x24] sm:$0xf]
        %v480 = vld [vmem:[#allocation5 + $0x28] sm:$0xf]
        %v481 = vld [vmem:[#allocation5 + $0x2c] sm:$0xf]
        %v482 = vld [vmem:[#allocation5 + $0x30] sm:$0xf]
        %v483 = vld [vmem:[#allocation5 + $0x34] sm:$0xf]
        %v484 = vld [vmem:[#allocation5 + $0x38] sm:$0xf]
        %v485 = vld [vmem:[#allocation5 + $0x3c] sm:$0xf]
        %v486 = vld [vmem:[%s346] sm:$0xff]
        %v487 = vld [vmem:[%s346 + $0x8] sm:$0xff]
        %v488 = vld [vmem:[%s346 + $0x10] sm:$0xff]
        %v489 = vld [vmem:[%s346 + $0x18] sm:$0xff]
        %v490 = vld [vmem:[%s346 + $0x20] sm:$0xff]
        %v491 = vld [vmem:[%s346 + $0x28] sm:$0xff]
        %v492 = vld [vmem:[%s346 + $0x30] sm:$0xff]
        %v493 = vld [vmem:[%s346 + $0x38] sm:$0xff]
        %v494 = vld [vmem:[#allocation7] sm:$0xf]
        %v495 = vld [vmem:[#allocation7 + $0x4] sm:$0xf]
        %v496 = vld [vmem:[#allocation7 + $0x8] sm:$0xf]
        %v497 = vld [vmem:[#allocation7 + $0xc] sm:$0xf]
        %v498 = vld [vmem:[#allocation7 + $0x10] sm:$0xf]
        %v499 = vld [vmem:[#allocation7 + $0x14] sm:$0xf]
        %v500 = vld [vmem:[#allocation7 + $0x18] sm:$0xf]
        %v501 = vld [vmem:[#allocation7 + $0x1c] sm:$0xf]
        %v502 = vld [vmem:[#allocation7 + $0x20] sm:$0xf]
        %v503 = vld [vmem:[#allocation7 + $0x24] sm:$0xf]
        %v504 = vld [vmem:[#allocation7 + $0x28] sm:$0xf]
        %v505 = vld [vmem:[#allocation7 + $0x2c] sm:$0xf]
        %v506 = vld [vmem:[#allocation7 + $0x30] sm:$0xf]
        %v507 = vld [vmem:[#allocation7 + $0x34] sm:$0xf]
        %v508 = vld [vmem:[#allocation7 + $0x38] sm:$0xf]
        %v509 = vld [vmem:[#allocation7 + $0x3c] sm:$0xf]
        %v510 = vld [vmem:[#allocation7 + $0x40] sm:$0xf]
        %v511 = vld [vmem:[#allocation7 + $0x44] sm:$0xf]
        %v512 = vld [vmem:[#allocation7 + $0x48] sm:$0xf]
        %v513 = vld [vmem:[#allocation7 + $0x4c] sm:$0xf]
        %v514 = vld [vmem:[#allocation7 + $0x50] sm:$0xf]
        %v515 = vld [vmem:[#allocation7 + $0x54] sm:$0xf]
        %v516 = vld [vmem:[#allocation7 + $0x58] sm:$0xf]
        %v517 = vld [vmem:[#allocation7 + $0x5c] sm:$0xf]
        %v518 = vld [vmem:[#allocation7 + $0x60] sm:$0xf]
        %v519 = vld [vmem:[#allocation7 + $0x64] sm:$0xf]
        %v520 = vld [vmem:[#allocation7 + $0x68] sm:$0xf]
        %v521 = vld [vmem:[#allocation7 + $0x6c] sm:$0xf]
        %v522 = vld [vmem:[#allocation7 + $0x70] sm:$0xf]
        %v523 = vld [vmem:[#allocation7 + $0x74] sm:$0xf]
        %v524 = vld [vmem:[#allocation7 + $0x78] sm:$0xf]
        %v525 = vld [vmem:[#allocation7 + $0x7c] sm:$0xf]
        %v526 = vld [vmem:[#allocation7 + $0x80] sm:$0xf]
        %v527 = vld [vmem:[#allocation7 + $0x84] sm:$0xf]
        %v528 = vld [vmem:[#allocation7 + $0x88] sm:$0xf]
        %v529 = vld [vmem:[#allocation7 + $0x8c] sm:$0xf]
        %v530 = vld [vmem:[#allocation7 + $0x90] sm:$0xf]
        %v531 = vld [vmem:[#allocation7 + $0x94] sm:$0xf]
        %v532 = vld [vmem:[#allocation7 + $0x98] sm:$0xf]
        %v533 = vld [vmem:[#allocation7 + $0x9c] sm:$0xf]
        %v534 = vld [vmem:[#allocation7 + $0xa0] sm:$0xf]
        %v535 = vld [vmem:[#allocation7 + $0xa4] sm:$0xf]
        %v536 = vld [vmem:[#allocation7 + $0xa8] sm:$0xf]
        %v537 = vld [vmem:[#allocation7 + $0xac] sm:$0xf]
        %v538 = vld [vmem:[#allocation7 + $0xb0] sm:$0xf]
        %v539 = vld [vmem:[#allocation7 + $0xb4] sm:$0xf]
        %v540 = vld [vmem:[#allocation7 + $0xb8] sm:$0xf]
        %v541 = vld [vmem:[#allocation7 + $0xbc] sm:$0xf]
        %v542 = vld [vmem:[#allocation7 + $0xc0] sm:$0xf]
        %v543 = vld [vmem:[#allocation7 + $0xc4] sm:$0xf]
        %v544 = vld [vmem:[#allocation7 + $0xc8] sm:$0xf]
        %v545 = vld [vmem:[#allocation7 + $0xcc] sm:$0xf]
        %v546 = vld [vmem:[#allocation7 + $0xd0] sm:$0xf]
        %v547 = vld [vmem:[#allocation7 + $0xd4] sm:$0xf]
        %v548 = vld [vmem:[#allocation7 + $0xd8] sm:$0xf]
        %v549 = vld [vmem:[#allocation7 + $0xdc] sm:$0xf]
        %v550 = vld [vmem:[#allocation7 + $0xe0] sm:$0xf]
        %v551 = vld [vmem:[#allocation7 + $0xe4] sm:$0xf]
        %v552 = vld [vmem:[#allocation7 + $0xe8] sm:$0xf]
        %v553 = vld [vmem:[#allocation7 + $0xec] sm:$0xf]
        %v554 = vld [vmem:[#allocation7 + $0xf0] sm:$0xf]
        %v555 = vld [vmem:[#allocation7 + $0xf4] sm:$0xf]
        %v556 = vld [vmem:[#allocation7 + $0xf8] sm:$0xf]
        %v557 = vld [vmem:[#allocation7 + $0xfc] sm:$0xf]
        %v558 = vld [vmem:[#allocation7 + $0x100] sm:$0xf]
        %v559 = vld [vmem:[#allocation7 + $0x104] sm:$0xf]
        %v560 = vld [vmem:[#allocation7 + $0x108] sm:$0xf]
        %v561 = vld [vmem:[#allocation7 + $0x10c] sm:$0xf]
        %v562 = vld [vmem:[#allocation7 + $0x110] sm:$0xf]
        %v563 = vld [vmem:[#allocation7 + $0x114] sm:$0xf]
        %v564 = vld [vmem:[#allocation7 + $0x118] sm:$0xf]
        %v565 = vld [vmem:[#allocation7 + $0x11c] sm:$0xf]
        %v566 = vld [vmem:[#allocation7 + $0x120] sm:$0xf]
        %v567 = vld [vmem:[#allocation7 + $0x124] sm:$0xf]
        %v568 = vld [vmem:[#allocation7 + $0x128] sm:$0xf]
        %v569 = vld [vmem:[#allocation7 + $0x12c] sm:$0xf]
        %v570 = vld [vmem:[#allocation7 + $0x130] sm:$0xf]
        %v571 = vld [vmem:[#allocation7 + $0x134] sm:$0xf]
        %v572 = vld [vmem:[#allocation7 + $0x138] sm:$0xf]
        %v573 = vld [vmem:[#allocation7 + $0x13c] sm:$0xf]
        %v574 = vld [vmem:[#allocation7 + $0x140] sm:$0xf]
        %v575 = vld [vmem:[#allocation7 + $0x144] sm:$0xf]
        %v576 = vld [vmem:[#allocation7 + $0x148] sm:$0xf]
        %v577 = vld [vmem:[#allocation7 + $0x14c] sm:$0xf]
        %v578 = vld [vmem:[#allocation7 + $0x150] sm:$0xf]
        %v579 = vld [vmem:[#allocation7 + $0x154] sm:$0xf]
        %v580 = vld [vmem:[#allocation7 + $0x158] sm:$0xf]
        %v581 = vld [vmem:[#allocation7 + $0x15c] sm:$0xf]
        %v582 = vld [vmem:[#allocation7 + $0x160] sm:$0xf]
        %v583 = vld [vmem:[#allocation7 + $0x164] sm:$0xf]
        %v584 = vld [vmem:[#allocation7 + $0x168] sm:$0xf]
        %v585 = vld [vmem:[#allocation7 + $0x16c] sm:$0xf]
        %v586 = vld [vmem:[#allocation7 + $0x170] sm:$0xf]
        %v587 = vld [vmem:[#allocation7 + $0x174] sm:$0xf]
        %v588 = vld [vmem:[#allocation7 + $0x178] sm:$0xf]
        %v589 = vld [vmem:[#allocation7 + $0x17c] sm:$0xf]
        %v590 = vld [vmem:[#allocation7 + $0x180] sm:$0xf]
        %v591 = vld [vmem:[#allocation7 + $0x184] sm:$0xf]
        %v592 = vld [vmem:[#allocation7 + $0x188] sm:$0xf]
        %v593 = vld [vmem:[#allocation7 + $0x18c] sm:$0xf]
        %v594 = vld [vmem:[#allocation7 + $0x190] sm:$0xf]
        %v595 = vld [vmem:[#allocation7 + $0x194] sm:$0xf]
        %v596 = vld [vmem:[#allocation7 + $0x198] sm:$0xf]
        %v597 = vld [vmem:[#allocation7 + $0x19c] sm:$0xf]
        %v598 = vld [vmem:[#allocation7 + $0x1a0] sm:$0xf]
        %v599 = vld [vmem:[#allocation7 + $0x1a4] sm:$0xf]
        %v600 = vld [vmem:[#allocation7 + $0x1a8] sm:$0xf]
        %v601 = vld [vmem:[#allocation7 + $0x1ac] sm:$0xf]
        %v602 = vld [vmem:[#allocation7 + $0x1b0] sm:$0xf]
        %v603 = vld [vmem:[#allocation7 + $0x1b4] sm:$0xf]
        %v604 = vld [vmem:[#allocation7 + $0x1b8] sm:$0xf]
        %v605 = vld [vmem:[#allocation7 + $0x1bc] sm:$0xf]
        %v606 = vld [vmem:[#allocation7 + $0x1c0] sm:$0xf]
        %v607 = vld [vmem:[#allocation7 + $0x1c4] sm:$0xf]
        %v608 = vld [vmem:[#allocation7 + $0x1c8] sm:$0xf]
        %v609 = vld [vmem:[#allocation7 + $0x1cc] sm:$0xf]
        %v610 = vld [vmem:[#allocation7 + $0x1d0] sm:$0xf]
        %v611 = vld [vmem:[#allocation7 + $0x1d4] sm:$0xf]
        %v612 = vld [vmem:[#allocation7 + $0x1d8] sm:$0xf]
        %v613 = vld [vmem:[#allocation7 + $0x1dc] sm:$0xf]
        %v614 = vld [vmem:[#allocation7 + $0x1e0] sm:$0xf]
        %v615 = vld [vmem:[#allocation7 + $0x1e4] sm:$0xf]
        %v616 = vld [vmem:[#allocation7 + $0x1e8] sm:$0xf]
        %v617 = vld [vmem:[#allocation7 + $0x1ec] sm:$0xf]
        %v618 = vld [vmem:[#allocation7 + $0x1f0] sm:$0xf]
        %v619 = vld [vmem:[#allocation7 + $0x1f4] sm:$0xf]
        %v620 = vld [vmem:[#allocation7 + $0x1f8] sm:$0xf]
        %v621 = vld [vmem:[#allocation7 + $0x1fc] sm:$0xf]
        %v630 = vunpack.c.l.b16 %v486
        %v631 = vunpack.c.h.b16 %v486
        %v632 = vunpack.c.l.b16 %v487
        %v633 = vunpack.c.h.b16 %v487
        %v634 = vunpack.c.l.b16 %v488
        %v635 = vunpack.c.h.b16 %v488
        %v636 = vunpack.c.l.b16 %v489
        %v637 = vunpack.c.h.b16 %v489
        %v638 = vunpack.c.l.b16 %v490
        %v639 = vunpack.c.h.b16 %v490
        %v640 = vunpack.c.l.b16 %v491
        %v641 = vunpack.c.h.b16 %v491
        %v642 = vunpack.c.l.b16 %v492
        %v643 = vunpack.c.h.b16 %v492
        %v644 = vunpack.c.l.b16 %v493
        %v645 = vunpack.c.h.b16 %v493
        %v646 = vpack.c.b16 %v638, %v630
        %v647 = vpack.c.b16 %v639, %v631
        %v648 = vpack.c.b16 %v640, %v632
        %v649 = vpack.c.b16 %v641, %v633
        %v650 = vpack.c.b16 %v642, %v634
        %v651 = vpack.c.b16 %v643, %v635
        %v652 = vpack.c.b16 %v644, %v636
        %v653 = vpack.c.b16 %v645, %v637
        %v790 = vunpack.c.l.b16 %v494
        %v791 = vunpack.c.l.b16 %v495
        %v792 = vunpack.c.l.b16 %v496
        %v793 = vunpack.c.l.b16 %v497
        %v794 = vunpack.c.l.b16 %v498
        %v795 = vunpack.c.l.b16 %v499
        %v796 = vunpack.c.l.b16 %v500
        %v797 = vunpack.c.l.b16 %v501
        %v798 = vunpack.c.l.b16 %v502
        %v799 = vunpack.c.l.b16 %v503
        %v800 = vunpack.c.l.b16 %v504
        %v801 = vunpack.c.l.b16 %v505
        %v802 = vunpack.c.l.b16 %v506
        %v803 = vunpack.c.l.b16 %v507
        %v804 = vunpack.c.l.b16 %v508
        %v805 = vunpack.c.l.b16 %v509
        %v806 = vunpack.c.l.b16 %v510
        %v807 = vunpack.c.l.b16 %v511
        %v808 = vunpack.c.l.b16 %v512
        %v809 = vunpack.c.l.b16 %v513
        %v810 = vunpack.c.l.b16 %v514
        %v811 = vunpack.c.l.b16 %v515
        %v812 = vunpack.c.l.b16 %v516
        %v813 = vunpack.c.l.b16 %v517
        %v814 = vunpack.c.l.b16 %v518
        %v815 = vunpack.c.l.b16 %v519
        %v816 = vunpack.c.l.b16 %v520
        %v817 = vunpack.c.l.b16 %v521
        %v818 = vunpack.c.l.b16 %v522
        %v819 = vunpack.c.l.b16 %v523
        %v820 = vunpack.c.l.b16 %v524
        %v821 = vunpack.c.l.b16 %v525
        %v822 = vunpack.c.l.b16 %v526
        %v823 = vunpack.c.l.b16 %v527
        %v824 = vunpack.c.l.b16 %v528
        %v825 = vunpack.c.l.b16 %v529
        %v826 = vunpack.c.l.b16 %v530
        %v827 = vunpack.c.l.b16 %v531
        %v828 = vunpack.c.l.b16 %v532
        %v829 = vunpack.c.l.b16 %v533
        %v830 = vunpack.c.l.b16 %v534
        %v831 = vunpack.c.l.b16 %v535
        %v832 = vunpack.c.l.b16 %v536
        %v833 = vunpack.c.l.b16 %v537
        %v834 = vunpack.c.l.b16 %v538
        %v835 = vunpack.c.l.b16 %v539
        %v836 = vunpack.c.l.b16 %v540
        %v837 = vunpack.c.l.b16 %v541
        %v838 = vunpack.c.l.b16 %v542
        %v839 = vunpack.c.l.b16 %v543
        %v840 = vunpack.c.l.b16 %v544
        %v841 = vunpack.c.l.b16 %v545
        %v842 = vunpack.c.l.b16 %v546
        %v843 = vunpack.c.l.b16 %v547
        %v844 = vunpack.c.l.b16 %v548
        %v845 = vunpack.c.l.b16 %v549
        %v846 = vunpack.c.l.b16 %v550
        %v847 = vunpack.c.l.b16 %v551
        %v848 = vunpack.c.l.b16 %v552
        %v849 = vunpack.c.l.b16 %v553
        %v850 = vunpack.c.l.b16 %v554
        %v851 = vunpack.c.l.b16 %v555
        %v852 = vunpack.c.l.b16 %v556
        %v853 = vunpack.c.l.b16 %v557
        %v854 = vunpack.c.l.b16 %v558
        %v855 = vunpack.c.l.b16 %v559
        %v856 = vunpack.c.l.b16 %v560
        %v857 = vunpack.c.l.b16 %v561
        %v858 = vunpack.c.l.b16 %v562
        %v859 = vunpack.c.l.b16 %v563
        %v860 = vunpack.c.l.b16 %v564
        %v861 = vunpack.c.l.b16 %v565
        %v862 = vunpack.c.l.b16 %v566
        %v863 = vunpack.c.l.b16 %v567
        %v864 = vunpack.c.l.b16 %v568
        %v865 = vunpack.c.l.b16 %v569
        %v866 = vunpack.c.l.b16 %v570
        %v867 = vunpack.c.l.b16 %v571
        %v868 = vunpack.c.l.b16 %v572
        %v869 = vunpack.c.l.b16 %v573
        %v870 = vunpack.c.l.b16 %v574
        %v871 = vunpack.c.l.b16 %v575
        %v872 = vunpack.c.l.b16 %v576
        %v873 = vunpack.c.l.b16 %v577
        %v874 = vunpack.c.l.b16 %v578
        %v875 = vunpack.c.l.b16 %v579
        %v876 = vunpack.c.l.b16 %v580
        %v877 = vunpack.c.l.b16 %v581
        %v878 = vunpack.c.l.b16 %v582
        %v879 = vunpack.c.l.b16 %v583
        %v880 = vunpack.c.l.b16 %v584
        %v881 = vunpack.c.l.b16 %v585
        %v882 = vunpack.c.l.b16 %v586
        %v883 = vunpack.c.l.b16 %v587
        %v884 = vunpack.c.l.b16 %v588
        %v885 = vunpack.c.l.b16 %v589
        %v886 = vunpack.c.l.b16 %v590
        %v887 = vunpack.c.l.b16 %v591
        %v888 = vunpack.c.l.b16 %v592
        %v889 = vunpack.c.l.b16 %v593
        %v890 = vunpack.c.l.b16 %v594
        %v891 = vunpack.c.l.b16 %v595
        %v892 = vunpack.c.l.b16 %v596
        %v893 = vunpack.c.l.b16 %v597
        %v894 = vunpack.c.l.b16 %v598
        %v895 = vunpack.c.l.b16 %v599
        %v896 = vunpack.c.l.b16 %v600
        %v897 = vunpack.c.l.b16 %v601
        %v898 = vunpack.c.l.b16 %v602
        %v899 = vunpack.c.l.b16 %v603
        %v900 = vunpack.c.l.b16 %v604
        %v901 = vunpack.c.l.b16 %v605
        %v902 = vunpack.c.l.b16 %v606
        %v903 = vunpack.c.l.b16 %v607
        %v904 = vunpack.c.l.b16 %v608
        %v905 = vunpack.c.l.b16 %v609
        %v906 = vunpack.c.l.b16 %v610
        %v907 = vunpack.c.l.b16 %v611
        %v908 = vunpack.c.l.b16 %v612
        %v909 = vunpack.c.l.b16 %v613
        %v910 = vunpack.c.l.b16 %v614
        %v911 = vunpack.c.l.b16 %v615
        %v912 = vunpack.c.l.b16 %v616
        %v913 = vunpack.c.l.b16 %v617
        %v914 = vunpack.c.l.b16 %v618
        %v915 = vunpack.c.l.b16 %v619
        %v916 = vunpack.c.l.b16 %v620
        %v917 = vunpack.c.l.b16 %v621
        %v918 = vpack.c.b16 %v791, %v790
        %v919 = vpack.c.b16 %v793, %v792
        %v920 = vpack.c.b16 %v795, %v794
        %v921 = vpack.c.b16 %v797, %v796
        %v922 = vpack.c.b16 %v799, %v798
        %v923 = vpack.c.b16 %v801, %v800
        %v924 = vpack.c.b16 %v803, %v802
        %v925 = vpack.c.b16 %v805, %v804
        %v926 = vpack.c.b16 %v807, %v806
        %v927 = vpack.c.b16 %v809, %v808
        %v928 = vpack.c.b16 %v811, %v810
        %v929 = vpack.c.b16 %v813, %v812
        %v930 = vpack.c.b16 %v815, %v814
        %v931 = vpack.c.b16 %v817, %v816
        %v932 = vpack.c.b16 %v819, %v818
        %v933 = vpack.c.b16 %v821, %v820
        %v934 = vpack.c.b16 %v823, %v822
        %v935 = vpack.c.b16 %v825, %v824
        %v936 = vpack.c.b16 %v827, %v826
        %v937 = vpack.c.b16 %v829, %v828
        %v938 = vpack.c.b16 %v831, %v830
        %v939 = vpack.c.b16 %v833, %v832
        %v940 = vpack.c.b16 %v835, %v834
        %v941 = vpack.c.b16 %v837, %v836
        %v942 = vpack.c.b16 %v839, %v838
        %v943 = vpack.c.b16 %v841, %v840
        %v944 = vpack.c.b16 %v843, %v842
        %v945 = vpack.c.b16 %v845, %v844
        %v946 = vpack.c.b16 %v847, %v846
        %v947 = vpack.c.b16 %v849, %v848
        %v948 = vpack.c.b16 %v851, %v850
        %v949 = vpack.c.b16 %v853, %v852
        %v950 = vpack.c.b16 %v855, %v854
        %v951 = vpack.c.b16 %v857, %v856
        %v952 = vpack.c.b16 %v859, %v858
        %v953 = vpack.c.b16 %v861, %v860
        %v954 = vpack.c.b16 %v863, %v862
        %v955 = vpack.c.b16 %v865, %v864
        %v956 = vpack.c.b16 %v867, %v866
        %v957 = vpack.c.b16 %v869, %v868
        %v958 = vpack.c.b16 %v871, %v870
        %v959 = vpack.c.b16 %v873, %v872
        %v960 = vpack.c.b16 %v875, %v874
        %v961 = vpack.c.b16 %v877, %v876
        %v962 = vpack.c.b16 %v879, %v878
        %v963 = vpack.c.b16 %v881, %v880
        %v964 = vpack.c.b16 %v883, %v882
        %v965 = vpack.c.b16 %v885, %v884
        %v966 = vpack.c.b16 %v887, %v886
        %v967 = vpack.c.b16 %v889, %v888
        %v968 = vpack.c.b16 %v891, %v890
        %v969 = vpack.c.b16 %v893, %v892
        %v970 = vpack.c.b16 %v895, %v894
        %v971 = vpack.c.b16 %v897, %v896
        %v972 = vpack.c.b16 %v899, %v898
        %v973 = vpack.c.b16 %v901, %v900
        %v974 = vpack.c.b16 %v903, %v902
        %v975 = vpack.c.b16 %v905, %v904
        %v976 = vpack.c.b16 %v907, %v906
        %v977 = vpack.c.b16 %v909, %v908
        %v978 = vpack.c.b16 %v911, %v910
        %v979 = vpack.c.b16 %v913, %v912
        %v980 = vpack.c.b16 %v915, %v914
        %v981 = vpack.c.b16 %v917, %v916
        %1046 = vmatprep.subr.bf16.mxu0 0
        %1047 = vmatpush1.bf16.msra.mxu0 %v918
        %1048 = vmatprep.subr.bf16.mxu0 0
        %1049 = vmatpush1.bf16.msra.mxu0 %v919
        %1050 = vmatprep.subr.bf16.mxu0 0
        %1051 = vmatpush1.bf16.msra.mxu0 %v920
        %1052 = vmatprep.subr.bf16.mxu0 0
        %1053 = vmatpush1.bf16.msra.mxu0 %v921
        %1054 = vmatprep.subr.bf16.mxu0 0
        %1055 = vmatpush1.bf16.msra.mxu0 %v922
        %1056 = vmatprep.subr.bf16.mxu0 0
        %1057 = vmatpush1.bf16.msra.mxu0 %v923
        %1058 = vmatprep.subr.bf16.mxu0 0
        %1059 = vmatpush1.bf16.msra.mxu0 %v924
        %1060 = vmatprep.subr.bf16.mxu0 0
        %1061 = vmatpush1.bf16.msra.mxu0 %v925
        %1062 = vmatprep.subr.bf16.mxu0 0
        %1063 = vmatpush1.bf16.msra.mxu0 %v926
        %1064 = vmatprep.subr.bf16.mxu0 0
        %1065 = vmatpush1.bf16.msra.mxu0 %v927
        %1066 = vmatprep.subr.bf16.mxu0 0
        %1067 = vmatpush1.bf16.msra.mxu0 %v928
        %1068 = vmatprep.subr.bf16.mxu0 0
        %1069 = vmatpush1.bf16.msra.mxu0 %v929
        %1070 = vmatprep.subr.bf16.mxu0 0
        %1071 = vmatpush1.bf16.msra.mxu0 %v930
        %1072 = vmatprep.subr.bf16.mxu0 0
        %1073 = vmatpush1.bf16.msra.mxu0 %v931
        %1074 = vmatprep.subr.bf16.mxu0 0
        %1075 = vmatpush1.bf16.msra.mxu0 %v932
        %1076 = vmatprep.subr.bf16.mxu0 0
        %1077 = vmatpush1.bf16.msra.mxu0 %v933
        %1078 = vmatprep.mubr.bf16.mxu0 %v647
        %1079 = vmatmul.mubr.bf16.gmra.mrb[0].mxu0 %v646
        %v1080 = vpop.f32.mrb[0].mxu0
        %v1081 = vadd.f32 0.0, %v1080
        %v1082 = vpop.f32.mrb[0].mxu0
        %v1083 = vpop.f32.mrb[0].mxu0
        %v1084 = vadd.f32 0.0, %v1083
        %v1085 = vpop.f32.mrb[0].mxu0
        %1086 = vdwg.mxu0
        %1087 = vmatprep.subr.bf16.mxu0 0
        %1088 = vmatpush1.bf16.msra.mxu0 %v934
        %1089 = vmatprep.subr.bf16.mxu0 0
        %1090 = vmatpush1.bf16.msra.mxu0 %v935
        %1091 = vmatprep.subr.bf16.mxu0 0
        %1092 = vmatpush1.bf16.msra.mxu0 %v936
        %1093 = vmatprep.subr.bf16.mxu0 0
        %1094 = vmatpush1.bf16.msra.mxu0 %v937
        %1095 = vmatprep.subr.bf16.mxu0 0
        %1096 = vmatpush1.bf16.msra.mxu0 %v938
        %1097 = vmatprep.subr.bf16.mxu0 0
        %1098 = vmatpush1.bf16.msra.mxu0 %v939
        %1099 = vmatprep.subr.bf16.mxu0 0
        %1100 = vmatpush1.bf16.msra.mxu0 %v940
        %1101 = vmatprep.subr.bf16.mxu0 0
        %1102 = vmatpush1.bf16.msra.mxu0 %v941
        %1103 = vmatprep.subr.bf16.mxu0 0
        %1104 = vmatpush1.bf16.msra.mxu0 %v942
        %1105 = vmatprep.subr.bf16.mxu0 0
        %1106 = vmatpush1.bf16.msra.mxu0 %v943
        %1107 = vmatprep.subr.bf16.mxu0 0
        %1108 = vmatpush1.bf16.msra.mxu0 %v944
        %1109 = vmatprep.subr.bf16.mxu0 0
        %1110 = vmatpush1.bf16.msra.mxu0 %v945
        %1111 = vmatprep.subr.bf16.mxu0 0
        %1112 = vmatpush1.bf16.msra.mxu0 %v946
        %1113 = vmatprep.subr.bf16.mxu0 0
        %1114 = vmatpush1.bf16.msra.mxu0 %v947
        %1115 = vmatprep.subr.bf16.mxu0 0
        %1116 = vmatpush1.bf16.msra.mxu0 %v948
        %1117 = vmatprep.subr.bf16.mxu0 0
        %1118 = vmatpush1.bf16.msra.mxu0 %v949
        %1119 = vmatprep.mubr.bf16.mxu0 %v649
        %1120 = vmatmul.mubr.bf16.gmra.mrb[0].mxu0 %v648
        %v1121 = vpop.f32.mrb[0].mxu0
        %v1122 = vadd.f32 %v1081, %v1121
        %v1123 = vpop.f32.mrb[0].mxu0
        %v1124 = vpop.f32.mrb[0].mxu0
        %v1125 = vadd.f32 %v1084, %v1124
        %v1126 = vpop.f32.mrb[0].mxu0
        %1127 = vdwg.mxu0
        %1128 = vmatprep.subr.bf16.mxu0 0
        %1129 = vmatpush1.bf16.msra.mxu0 %v950
        %1130 = vmatprep.subr.bf16.mxu0 0
        %1131 = vmatpush1.bf16.msra.mxu0 %v951
        %1132 = vmatprep.subr.bf16.mxu0 0
        %1133 = vmatpush1.bf16.msra.mxu0 %v952
        %1134 = vmatprep.subr.bf16.mxu0 0
        %1135 = vmatpush1.bf16.msra.mxu0 %v953
        %1136 = vmatprep.subr.bf16.mxu0 0
        %1137 = vmatpush1.bf16.msra.mxu0 %v954
        %1138 = vmatprep.subr.bf16.mxu0 0
        %1139 = vmatpush1.bf16.msra.mxu0 %v955
        %1140 = vmatprep.subr.bf16.mxu0 0
        %1141 = vmatpush1.bf16.msra.mxu0 %v956
        %1142 = vmatprep.subr.bf16.mxu0 0
        %1143 = vmatpush1.bf16.msra.mxu0 %v957
        %1144 = vmatprep.subr.bf16.mxu0 0
        %1145 = vmatpush1.bf16.msra.mxu0 %v958
        %1146 = vmatprep.subr.bf16.mxu0 0
        %1147 = vmatpush1.bf16.msra.mxu0 %v959
        %1148 = vmatprep.subr.bf16.mxu0 0
        %1149 = vmatpush1.bf16.msra.mxu0 %v960
        %1150 = vmatprep.subr.bf16.mxu0 0
        %1151 = vmatpush1.bf16.msra.mxu0 %v961
        %1152 = vmatprep.subr.bf16.mxu0 0
        %1153 = vmatpush1.bf16.msra.mxu0 %v962
        %1154 = vmatprep.subr.bf16.mxu0 0
        %1155 = vmatpush1.bf16.msra.mxu0 %v963
        %1156 = vmatprep.subr.bf16.mxu0 0
        %1157 = vmatpush1.bf16.msra.mxu0 %v964
        %1158 = vmatprep.subr.bf16.mxu0 0
        %1159 = vmatpush1.bf16.msra.mxu0 %v965
        %1160 = vmatprep.mubr.bf16.mxu0 %v651
        %1161 = vmatmul.mubr.bf16.gmra.mrb[0].mxu0 %v650
        %v1162 = vpop.f32.mrb[0].mxu0
        %v1163 = vadd.f32 %v1122, %v1162
        %v1164 = vpop.f32.mrb[0].mxu0
        %v1165 = vpop.f32.mrb[0].mxu0
        %v1166 = vadd.f32 %v1125, %v1165
        %v1167 = vpop.f32.mrb[0].mxu0
        %1168 = vdwg.mxu0
        %1169 = vmatprep.subr.bf16.mxu0 0
        %1170 = vmatpush1.bf16.msra.mxu0 %v966
        %1171 = vmatprep.subr.bf16.mxu0 0
        %1172 = vmatpush1.bf16.msra.mxu0 %v967
        %1173 = vmatprep.subr.bf16.mxu0 0
        %1174 = vmatpush1.bf16.msra.mxu0 %v968
        %1175 = vmatprep.subr.bf16.mxu0 0
        %1176 = vmatpush1.bf16.msra.mxu0 %v969
        %1177 = vmatprep.subr.bf16.mxu0 0
        %1178 = vmatpush1.bf16.msra.mxu0 %v970
        %1179 = vmatprep.subr.bf16.mxu0 0
        %1180 = vmatpush1.bf16.msra.mxu0 %v971
        %1181 = vmatprep.subr.bf16.mxu0 0
        %1182 = vmatpush1.bf16.msra.mxu0 %v972
        %1183 = vmatprep.subr.bf16.mxu0 0
        %1184 = vmatpush1.bf16.msra.mxu0 %v973
        %1185 = vmatprep.subr.bf16.mxu0 0
        %1186 = vmatpush1.bf16.msra.mxu0 %v974
        %1187 = vmatprep.subr.bf16.mxu0 0
        %1188 = vmatpush1.bf16.msra.mxu0 %v975
        %1189 = vmatprep.subr.bf16.mxu0 0
        %1190 = vmatpush1.bf16.msra.mxu0 %v976
        %1191 = vmatprep.subr.bf16.mxu0 0
        %1192 = vmatpush1.bf16.msra.mxu0 %v977
        %1193 = vmatprep.subr.bf16.mxu0 0
        %1194 = vmatpush1.bf16.msra.mxu0 %v978
        %1195 = vmatprep.subr.bf16.mxu0 0
        %1196 = vmatpush1.bf16.msra.mxu0 %v979
        %1197 = vmatprep.subr.bf16.mxu0 0
        %1198 = vmatpush1.bf16.msra.mxu0 %v980
        %1199 = vmatprep.subr.bf16.mxu0 0
        %1200 = vmatpush1.bf16.msra.mxu0 %v981
        %1201 = vmatprep.mubr.bf16.mxu0 %v653
        %1202 = vmatmul.mubr.bf16.gmra.mrb[0].mxu0 %v652
        %v1203 = vpop.f32.mrb[0].mxu0
        %v1204 = vadd.f32 %v1163, %v1203
        %v1205 = vpop.f32.mrb[0].mxu0
        %v1206 = vpop.f32.mrb[0].mxu0
        %v1207 = vadd.f32 %v1166, %v1206
        %v1208 = vpop.f32.mrb[0].mxu0
        %1209 = vdwg.mxu0
        %v1212 = vunpack.c.l.b16 %v468
        %v1213 = vunpack.c.l.b16 %v469
        %v1214 = vpack.c.b16 %v1213, %v1212
        %v1232 = vunpack.c.l.b16 %v470
        %v1233 = vunpack.c.l.b16 %v471
        %v1234 = vunpack.c.l.b16 %v472
        %v1235 = vunpack.c.l.b16 %v473
        %v1236 = vunpack.c.l.b16 %v474
        %v1237 = vunpack.c.l.b16 %v475
        %v1238 = vunpack.c.l.b16 %v476
        %v1239 = vunpack.c.l.b16 %v477
        %v1240 = vunpack.c.l.b16 %v478
        %v1241 = vunpack.c.l.b16 %v479
        %v1242 = vunpack.c.l.b16 %v480
        %v1243 = vunpack.c.l.b16 %v481
        %v1244 = vunpack.c.l.b16 %v482
        %v1245 = vunpack.c.l.b16 %v483
        %v1246 = vunpack.c.l.b16 %v484
        %v1247 = vunpack.c.l.b16 %v485
        %v1248 = vpack.c.b16 %v1233, %v1232
        %v1249 = vpack.c.b16 %v1235, %v1234
        %v1250 = vpack.c.b16 %v1237, %v1236
        %v1251 = vpack.c.b16 %v1239, %v1238
        %v1252 = vpack.c.b16 %v1241, %v1240
        %v1253 = vpack.c.b16 %v1243, %v1242
        %v1254 = vpack.c.b16 %v1245, %v1244
        %v1255 = vpack.c.b16 %v1247, %v1246
        %1264 = vmatprep.subr.bf16.mxu0 0
        %1265 = vmatpush1.bf16.msra.mxu0 %v1248
        %1266 = vmatprep.subr.bf16.mxu0 0
        %1267 = vmatpush1.bf16.msra.mxu0 %v1249
        %1268 = vmatprep.subr.bf16.mxu0 0
        %1269 = vmatpush1.bf16.msra.mxu0 %v1250
        %1270 = vmatprep.subr.bf16.mxu0 0
        %1271 = vmatpush1.bf16.msra.mxu0 %v1251
        %1272 = vmatprep.subr.bf16.mxu0 0
        %1273 = vmatpush1.bf16.msra.mxu0 %v1252
        %1274 = vmatprep.subr.bf16.mxu0 0
        %1275 = vmatpush1.bf16.msra.mxu0 %v1253
        %1276 = vmatprep.subr.bf16.mxu0 0
        %1277 = vmatpush1.bf16.msra.mxu0 %v1254
        %1278 = vmatprep.subr.bf16.mxu0 0
        %1279 = vmatpush1.bf16.msra.mxu0 %v1255
        %1280 = vmatprep.subr.bf16.mxu0 0
        %1281 = vmatpush1.bf16.msra.mxu0 0
        %1282 = vmatprep.subr.bf16.mxu0 0
        %1283 = vmatpush1.bf16.msra.mxu0 0
        %1284 = vmatprep.subr.bf16.mxu0 0
        %1285 = vmatpush1.bf16.msra.mxu0 0
        %1286 = vmatprep.subr.bf16.mxu0 0
        %1287 = vmatpush1.bf16.msra.mxu0 0
        %1288 = vmatprep.subr.bf16.mxu0 0
        %1289 = vmatpush1.bf16.msra.mxu0 0
        %1290 = vmatprep.subr.bf16.mxu0 0
        %1291 = vmatpush1.bf16.msra.mxu0 0
        %1292 = vmatprep.subr.bf16.mxu0 0
        %1293 = vmatpush1.bf16.msra.mxu0 0
        %1294 = vmatprep.subr.bf16.mxu0 0
        %1295 = vmatpush1.bf16.msra.mxu0 0
        %1296 = vmatprep.mubr.bf16.mxu0 0
        %1297 = vmatmul.mubr.bf16.gmra.mrb[0].mxu0 %v1214
        %v1298 = vpop.f32.mrb[0].mxu0
        %v1299 = vadd.f32 %v1204, %v1298
        %v1300 = vpop.f32.mrb[0].mxu0
        %v1301 = vpop.f32.mrb[0].mxu0
        %v1302 = vadd.f32 %v1207, %v1301
        %v1303 = vpop.f32.mrb[0].mxu0
        %1304 = vdwg.mxu0
        %v1305 = vld [vmem:[%s5] sm:$0x1]
        %v1307 = vlaneseq
        %v1308 = vshrl.u32 %v1307, 7
        %v1309 = vsub.s32 0, %v1308
        %v1310 = vrot.slane %v1305, %v1309
        %v1312 = vadd.f32 %v1299, %v1310
        %v1313 = vadd.f32 %v1302, %v1310
        %v1314 = vmax.f32 %v1312, 0.0
        %v1315 = vmax.f32 %v1313, 0.0
        %v1316 = vpack.c.bf16 %v1315, %v1314
        %v1317 = vld [vmem:[#allocation8] sm:$0xf]
        %v1318 = vld [vmem:[#allocation8 + $0x4] sm:$0xf]
        %v1319 = vld [vmem:[#allocation8 + $0x8] sm:$0xf]
        %v1320 = vld [vmem:[#allocation8 + $0xc] sm:$0xf]
        %v1321 = vld [vmem:[#allocation8 + $0x10] sm:$0xf]
        %v1322 = vld [vmem:[#allocation8 + $0x14] sm:$0xf]
        %v1323 = vld [vmem:[#allocation8 + $0x18] sm:$0xf]
        %v1324 = vld [vmem:[#allocation8 + $0x1c] sm:$0xf]
        %v1325 = vld [vmem:[#allocation8 + $0x20] sm:$0xf]
        %v1326 = vld [vmem:[#allocation8 + $0x24] sm:$0xf]
        %v1327 = vld [vmem:[#allocation8 + $0x28] sm:$0xf]
        %v1328 = vld [vmem:[#allocation8 + $0x2c] sm:$0xf]
        %v1329 = vld [vmem:[#allocation8 + $0x30] sm:$0xf]
        %v1330 = vld [vmem:[#allocation8 + $0x34] sm:$0xf]
        %v1331 = vld [vmem:[#allocation8 + $0x38] sm:$0xf]
        %v1332 = vld [vmem:[#allocation8 + $0x3c] sm:$0xf]
        %v1333 = vld [vmem:[%s7] sm:$0x1]
        %v1335 = vlaneseq
        %v1336 = vshrl.u32 %v1335, 7
        %v1337 = vsub.s32 0, %v1336
        %v1338 = vrot.slane %v1333, %v1337
        %v1356 = vunpack.c.l.b16 %v1317
        %v1357 = vunpack.c.l.b16 %v1318
        %v1358 = vunpack.c.l.b16 %v1319
        %v1359 = vunpack.c.l.b16 %v1320
        %v1360 = vunpack.c.l.b16 %v1321
        %v1361 = vunpack.c.l.b16 %v1322
        %v1362 = vunpack.c.l.b16 %v1323
        %v1363 = vunpack.c.l.b16 %v1324
        %v1364 = vunpack.c.l.b16 %v1325
        %v1365 = vunpack.c.l.b16 %v1326
        %v1366 = vunpack.c.l.b16 %v1327
        %v1367 = vunpack.c.l.b16 %v1328
        %v1368 = vunpack.c.l.b16 %v1329
        %v1369 = vunpack.c.l.b16 %v1330
        %v1370 = vunpack.c.l.b16 %v1331
        %v1371 = vunpack.c.l.b16 %v1332
        %v1372 = vpack.c.b16 %v1357, %v1356
        %v1373 = vpack.c.b16 %v1359, %v1358
        %v1374 = vpack.c.b16 %v1361, %v1360
        %v1375 = vpack.c.b16 %v1363, %v1362
        %v1376 = vpack.c.b16 %v1365, %v1364
        %v1377 = vpack.c.b16 %v1367, %v1366
        %v1378 = vpack.c.b16 %v1369, %v1368
        %v1379 = vpack.c.b16 %v1371, %v1370
        %1388 = vmatprep.subr.bf16.mxu0 0
        %1389 = vmatpush1.bf16.msra.mxu0 %v1372
        %1390 = vmatprep.subr.bf16.mxu0 0
        %1391 = vmatpush1.bf16.msra.mxu0 %v1373
        %1392 = vmatprep.subr.bf16.mxu0 0
        %1393 = vmatpush1.bf16.msra.mxu0 %v1374
        %1394 = vmatprep.subr.bf16.mxu0 0
        %1395 = vmatpush1.bf16.msra.mxu0 %v1375
        %1396 = vmatprep.subr.bf16.mxu0 0
        %1397 = vmatpush1.bf16.msra.mxu0 %v1376
        %1398 = vmatprep.subr.bf16.mxu0 0
        %1399 = vmatpush1.bf16.msra.mxu0 %v1377
        %1400 = vmatprep.subr.bf16.mxu0 0
        %1401 = vmatpush1.bf16.msra.mxu0 %v1378
        %1402 = vmatprep.subr.bf16.mxu0 0
        %1403 = vmatpush1.bf16.msra.mxu0 %v1379
        %1404 = vmatprep.subr.bf16.mxu0 0
        %1405 = vmatpush1.bf16.msra.mxu0 0
        %1406 = vmatprep.subr.bf16.mxu0 0
        %1407 = vmatpush1.bf16.msra.mxu0 0
        %1408 = vmatprep.subr.bf16.mxu0 0
        %1409 = vmatpush1.bf16.msra.mxu0 0
        %1410 = vmatprep.subr.bf16.mxu0 0
        %1411 = vmatpush1.bf16.msra.mxu0 0
        %1412 = vmatprep.subr.bf16.mxu0 0
        %1413 = vmatpush1.bf16.msra.mxu0 0
        %1414 = vmatprep.subr.bf16.mxu0 0
        %1415 = vmatpush1.bf16.msra.mxu0 0
        %1416 = vmatprep.subr.bf16.mxu0 0
        %1417 = vmatpush1.bf16.msra.mxu0 0
        %1418 = vmatprep.subr.bf16.mxu0 0
        %1419 = vmatpush1.bf16.msra.mxu0 0
        %1420 = vmatprep.mubr.bf16.mxu0 0
        %1421 = vmatmul.mubr.bf16.gmra.mrb[0].mxu0 %v1316
        %v1422 = vpop.f32.mrb[0].mxu0
        %v1423 = vadd.f32 %v1338, %v1422
        %v1424 = vpop.f32.mrb[0].mxu0
        %v1425 = vpop.f32.mrb[0].mxu0
        %v1426 = vadd.f32 %v1338, %v1425
        %v1427 = vpop.f32.mrb[0].mxu0
        %1428 = vdwg.mxu0
        %v1429 = vpack.c.bf16 %v1426, %v1423
        %v1431 = vunpack.c.l.b16 %v1429
        %v1432 = vunpack.c.h.b16 %v1429
        %v1433 = vpack.c.b16 %v1431, %v1431
        %v1434 = vpack.c.b16 %v1432, %v1432
        %1437 = vst [vmem:[%s400] sm:$0xf] %v1433
        %1438 = vst [vmem:[%s400 + $0x4] sm:$0xf] %v1434
        %s1439 = sand.u32 %s218, 1
        %s1440 = scalar_lea.sflag [#allocation4], %s1439
        %s1441 = sand.u32 %s218, 1
        %s1442 = smul.addr %s1441, 8
        %s1443 = scalar_lea.vmem [#allocation10], %s1442
        // Predicated region
        $region69: #{tpu_custom_call.1} parent=51 // pred_check
          %p1444 = pneg %p228
        $region70: #{tpu_custom_call.1} parent=51 // pred_check_branch
          %1446 = sbr.rel (%p1444) target = $region72
        $region71: #{tpu_custom_call.1} parent=51 // pred_region
          %s1447 = smul.u32 2, %s27
          %s1449 = ssub.s32 128, 128
          %1450 = vsyncadd %s1440, %s1449
          %s1451 = smul.addr %s1447, 64
          %s1452 = scalar_lea.hbm %s8, %s1451
          %s1453 = sshll.u32 %s1443, 4
          %s1454 = int_to_ptr.vmem [resolvable:$true] %s1453
          %1459 = dma.vmem_to_hbm [thread:$0]  %s1454, 128, %s1452, %s1440, 64, 64, 4
        $region72: #{tpu_custom_call.1} parent=51 // pred_fallthru
          _
      $region52: #{tpu_custom_call.1} parent=5 // pred_fallthru
        _
      %p1460 = scmp.le.s32.totalorder 2, %s22
      // Predicated region
      $region73: #{tpu_custom_call.1} parent=5 // pred_check
        %p1461 = pneg %p1460
      $region74: #{tpu_custom_call.1} parent=5 // pred_check_branch
        %1463 = sbr.rel (%p1461) target = $region76
      $region75: #{tpu_custom_call.1} parent=5 // pred_region
        %s1464 = ssub.s32 %s22, 2
        // Predicated region
        $region77: #{tpu_custom_call.1} parent=75 // pred_check
          %p1465 = pneg %p234
        $region78: #{tpu_custom_call.1} parent=75 // pred_check_branch
          %1467 = sbr.rel (%p1465) target = $region80
        $region79: #{tpu_custom_call.1} parent=75 // pred_region
          %s1468 = sand.u32 %s219, 1
          %s1469 = scalar_lea.sflag [#allocation4], %s1468
          %s1470 = sand.u32 %s219, 1
          %s1471 = smul.addr %s1470, 8
          %s1472 = scalar_lea.vmem [#allocation10], %s1471
          %1473 = dma.done %s1469, 128
        $region80: #{tpu_custom_call.1} parent=75 // pred_fallthru
          _
      $region76: #{tpu_custom_call.1} parent=5 // pred_fallthru
        _
    $region6: #{tpu_custom_call.1} parent=1 // loop_footer
      %s26 = sadd.s32 1, %s22
    $region7: #{tpu_custom_call.1} parent=1 // loop_footer_branch
      %21 = sbr.rel target = $region3
    $region8: #{tpu_custom_call.1} parent=1 // loop_exit
      _
    %1474 = vsyncpa [#allocation3], 1
    %s1475 = scalar_lea.sflag [#allocation3], 1
    %1476 = vsyncpa %s1475, 1
    %1477 = vsyncpa [#allocation6], 1
    %1478 = vsyncpa [#allocation9], 1
    %1479 = vsyncpa [#allocation4], 1
    %s1480 = scalar_lea.sflag [#allocation4], 1
    %1481 = vsyncpa %s1480, 1

// kernel: tpu_custom_call.1
$region0: #{tpu_custom_call.1}
  #allocation0 [shape = 'u32[]', space=smem, size = 0x4, offset = 0x4, fixed_abs, tag = 'smem constant byte address 0x4 - core index']
  #allocation1 [shape = 'u32[144,128]{1,0:T(1,128)}', space=vmem, size = 0x12000, scoped, tag = 'internal scratch']
  %s0 = inlined_call_operand.vmem [shape: bf16[32,128], index: 0, kind: input, shape index: {}]
  %s1 = inlined_call_operand.vmem [shape: s32[32,4], index: 1, kind: input, shape index: {}]
  %s2 = inlined_call_operand.hbm [shape: bf16[32,1024], index: 2, kind: input, shape index: {}]
  %s3 = inlined_call_operand.hbm [shape: bf16[128,128], index: 3, kind: input, shape index: {}]
  %s4 = inlined_call_operand.hbm [shape: bf16[1024,128], index: 4, kind: input, shape index: {}]
  %s5 = inlined_call_operand.vmem [shape: f32[1,128], index: 5, kind: input, shape index: {}]
  %s6 = inlined_call_operand.hbm [shape: bf16[128,128], index: 6, kind: input, shape index: {}]
  %s7 = inlined_call_operand.vmem [shape: f32[1,128], index: 7, kind: input, shape index: {}]
  %s8 = inlined_call_operand.hbm [shape: bf16[32,128], index: 8, kind: output, shape index: {}]
  %s9 = sld [smem:[#allocation0]]
  $region81: #{tpu_custom_call.1} parent=0
    _
  %s11 = ssub.s32 1, %s9
  %s12 = scalar_select 0, %s11, %s9
  $region1: #{tpu_custom_call.1} parent=0
    #allocation2 [shape = 'u8[65536]{0}', space=vmem, size = 0x10000, scoped, tag = 'input window, operand 2']
    #allocation3 [shape = 's32[2]{0}', space=sflag, size = 0x8, scoped, tag = 'scoped memory for tpu_custom_call.1']
    #allocation4 [shape = 's32[2]{0}', space=sflag, size = 0x8, scoped, tag = 'scoped memory for tpu_custom_call.1']
    #allocation5 [shape = 'u8[32768]{0}', space=vmem, size = 0x8000, scoped, tag = 'input window, operand 3, single buffered']
    #allocation6 [shape = 's32[1]{0}', space=sflag, size = 0x4, scoped, tag = 'scoped memory for tpu_custom_call.1']
    #allocation7 [shape = 'u8[262144]{0}', space=vmem, size = 0x40000, scoped, tag = 'input window, operand 4, single buffered']
    #allocation8 [shape = 'u8[32768]{0}', space=vmem, size = 0x8000, scoped, tag = 'input window, operand 6, single buffered']
    #allocation9 [shape = 's32[1]{0}', space=sflag, size = 0x4, scoped, tag = 'scoped memory for tpu_custom_call.1']
    #allocation10 [shape = 'u8[8192]{0}', space=vmem, size = 0x2000, scoped, tag = 'output window, operand 0']
    %13 = vsyncpa [#allocation3], 0
    %s14 = scalar_lea.sflag [#allocation3], 1
    %15 = vsyncpa %s14, 0
    %16 = vsyncpa [#allocation6], 0
    %17 = vsyncpa [#allocation9], 0
    %18 = vsyncpa [#allocation4], 0
    %s19 = scalar_lea.sflag [#allocation4], 1
    %20 = vsyncpa %s19, 0
    loop: start=0, step=1, limit=4
    $region2: #{tpu_custom_call.1} parent=1 // loop_pre_header
      _
    $region3: #{tpu_custom_call.1} parent=1 // loop_header
      %s22 = sphi 0, %s26
      %p23 = scmp.ge.s32.totalorder %s22, 4
      %s32 = sphi 0, %s34
      %s35 = sphi 0, %s32
      %s36 = sphi 0, %s35
      %s52 = sphi 0, %s36
      %s58 = sphi 0, %s60
      %s61 = sphi 0, %s58
      %s62 = sphi 0, %s61
      %s78 = sphi 0, %s62
      %s84 = sphi 0, %s86
      %s87 = sphi 0, %s84
      %s88 = sphi 0, %s87
      %s104 = sphi 0, %s88
      %s108 = sphi 0, %s108
      %s110 = sphi 0, %s108
      %s111 = sphi 0, %s110
      %s125 = sphi 0, %s111
      %s129 = sphi 0, %s129
      %s131 = sphi 0, %s129
      %s132 = sphi 0, %s131
      %s146 = sphi 0, %s132
      %s150 = sphi 0, %s150
      %s152 = sphi 0, %s150
      %s153 = sphi 0, %s152
      %s167 = sphi 0, %s153
      %s171 = sphi 0, %s171
      %s173 = sphi 0, %s171
      %s174 = sphi 0, %s173
      %s188 = sphi 0, %s174
      %s192 = sphi 0, %s192
      %s194 = sphi 0, %s192
      %s195 = sphi 0, %s194
      %s209 = sphi 0, %s195
      %s215 = sphi 0, %s217
      %s218 = sphi 0, %s215
      %s219 = sphi 0, %s218
      %s235 = sphi 0, %s219
    $region4: #{tpu_custom_call.1} parent=1 // loop_header_branch
      %25 = sbr.rel (%p23) target = $region8
    $region5: #{tpu_custom_call.1} parent=1 // loop_body
      %s27 = ssub.s32 %s22, 1
      %s28 = ssub.s32 %s22, 2
      %s29 = sadd.s32 %s22, 1
      %s30 = ssub.s32 %s22, %s29
      %p31 = scmp.eq.s32.totalorder %s30, 0
      %s33 = sadd.s32 %s32, 1
      %s34 = scalar_select %p31, %s32, %s33
      %p37 = pneg %p31
      %p38 = scmp.eq.s32.totalorder %s22, 1
      %p39 = por %p37, %p38
      %p40 = scmp.ne.s32.totalorder %s32, %s35
      %p41 = scmp.eq.s32.totalorder %s22, 0
      %p42 = por %p40, %p41
      %p43 = scmp.ne.s32.totalorder %s32, %s35
      %p44 = scmp.eq.s32.totalorder %s27, 1
      %p45 = por %p43, %p44
      %p46 = scmp.ne.s32.totalorder %s35, %s36
      %p47 = scmp.eq.s32.totalorder %s27, 0
      %p48 = por %p46, %p47
      %p49 = scmp.ne.s32.totalorder %s35, %s36
      %p50 = scmp.eq.s32.totalorder %s28, 1
      %p51 = por %p49, %p50
      %p53 = scmp.ne.s32.totalorder %s36, %s52
      %p54 = scmp.eq.s32.totalorder %s28, 0
      %p55 = por %p53, %p54
      %s56 = ssub.s32 %s22, %s29
      %p57 = scmp.eq.s32.totalorder %s56, 0
      %s59 = sadd.s32 %s58, 1
      %s60 = scalar_select %p57, %s58, %s59
      %p63 = pneg %p57
      %p64 = scmp.eq.s32.totalorder %s22, 1
      %p65 = por %p63, %p64
      %p66 = scmp.ne.s32.totalorder %s58, %s61
      %p67 = scmp.eq.s32.totalorder %s22, 0
      %p68 = por %p66, %p67
      %p69 = scmp.ne.s32.totalorder %s58, %s61
      %p70 = scmp.eq.s32.totalorder %s27, 1
      %p71 = por %p69, %p70
      %p72 = scmp.ne.s32.totalorder %s61, %s62
      %p73 = scmp.eq.s32.totalorder %s27, 0
      %p74 = por %p72, %p73
      %p75 = scmp.ne.s32.totalorder %s61, %s62
      %p76 = scmp.eq.s32.totalorder %s28, 1
      %p77 = por %p75, %p76
      %p79 = scmp.ne.s32.totalorder %s62, %s78
      %p80 = scmp.eq.s32.totalorder %s28, 0
      %p81 = por %p79, %p80
      %s82 = ssub.s32 %s22, %s29
      %p83 = scmp.eq.s32.totalorder %s82, 0
      %s85 = sadd.s32 %s84, 1
      %s86 = scalar_select %p83, %s84, %s85
      %p89 = pneg %p83
      %p90 = scmp.eq.s32.totalorder %s22, 1
      %p91 = por %p89, %p90
      %p92 = scmp.ne.s32.totalorder %s84, %s87
      %p93 = scmp.eq.s32.totalorder %s22, 0
      %p94 = por %p92, %p93
      %p95 = scmp.ne.s32.totalorder %s84, %s87
      %p96 = scmp.eq.s32.totalorder %s27, 1
      %p97 = por %p95, %p96
      %p98 = scmp.ne.s32.totalorder %s87, %s88
      %p99 = scmp.eq.s32.totalorder %s27, 0
      %p100 = por %p98, %p99
      %p101 = scmp.ne.s32.totalorder %s87, %s88
      %p102 = scmp.eq.s32.totalorder %s28, 1
      %p103 = por %p101, %p102
      %p105 = scmp.ne.s32.totalorder %s88, %s104
      %p106 = scmp.eq.s32.totalorder %s28, 0
      %p107 = por %p105, %p106
      %s109 = sadd.s32 %s108, 1
      %p112 = scmp.eq.s32.totalorder %s22, 1
      %p113 = scmp.ne.s32.totalorder %s108, %s110
      %p114 = scmp.eq.s32.totalorder %s22, 0
      %p115 = por %p113, %p114
      %p116 = scmp.ne.s32.totalorder %s108, %s110
      %p117 = scmp.eq.s32.totalorder %s27, 1
      %p118 = por %p116, %p117
      %p119 = scmp.ne.s32.totalorder %s110, %s111
      %p120 = scmp.eq.s32.totalorder %s27, 0
      %p121 = por %p119, %p120
      %p122 = scmp.ne.s32.totalorder %s110, %s111
      %p123 = scmp.eq.s32.totalorder %s28, 1
      %p124 = por %p122, %p123
      %p126 = scmp.ne.s32.totalorder %s111, %s125
      %p127 = scmp.eq.s32.totalorder %s28, 0
      %p128 = por %p126, %p127
      %s130 = sadd.s32 %s129, 1
      %p133 = scmp.eq.s32.totalorder %s22, 1
      %p134 = scmp.ne.s32.totalorder %s129, %s131
      %p135 = scmp.eq.s32.totalorder %s22, 0
      %p136 = por %p134, %p135
      %p137 = scmp.ne.s32.totalorder %s129, %s131
      %p138 = scmp.eq.s32.totalorder %s27, 1
      %p139 = por %p137, %p138
      %p140 = scmp.ne.s32.totalorder %s131, %s132
      %p141 = scmp.eq.s32.totalorder %s27, 0
      %p142 = por %p140, %p141
      %p143 = scmp.ne.s32.totalorder %s131, %s132
      %p144 = scmp.eq.s32.totalorder %s28, 1
      %p145 = por %p143, %p144
      %p147 = scmp.ne.s32.totalorder %s132, %s146
      %p148 = scmp.eq.s32.totalorder %s28, 0
      %p149 = por %p147, %p148
      %s151 = sadd.s32 %s150, 1
      %p154 = scmp.eq.s32.totalorder %s22, 1
      %p155 = scmp.ne.s32.totalorder %s150, %s152
      %p156 = scmp.eq.s32.totalorder %s22, 0
      %p157 = por %p155, %p156
      %p158 = scmp.ne.s32.totalorder %s150, %s152
      %p159 = scmp.eq.s32.totalorder %s27, 1
      %p160 = por %p158, %p159
      %p161 = scmp.ne.s32.totalorder %s152, %s153
      %p162 = scmp.eq.s32.totalorder %s27, 0
      %p163 = por %p161, %p162
      %p164 = scmp.ne.s32.totalorder %s152, %s153
      %p165 = scmp.eq.s32.totalorder %s28, 1
      %p166 = por %p164, %p165
      %p168 = scmp.ne.s32.totalorder %s153, %s167
      %p169 = scmp.eq.s32.totalorder %s28, 0
      %p170 = por %p168, %p169
      %s172 = sadd.s32 %s171, 1
      %p175 = scmp.eq.s32.totalorder %s22, 1
      %p176 = scmp.ne.s32.totalorder %s171, %s173
      %p177 = scmp.eq.s32.totalorder %s22, 0
      %p178 = por %p176, %p177
      %p179 = scmp.ne.s32.totalorder %s171, %s173
      %p180 = scmp.eq.s32.totalorder %s27, 1
      %p181 = por %p179, %p180
      %p182 = scmp.ne.s32.totalorder %s173, %s174
      %p183 = scmp.eq.s32.totalorder %s27, 0
      %p184 = por %p182, %p183
      %p185 = scmp.ne.s32.totalorder %s173, %s174
      %p186 = scmp.eq.s32.totalorder %s28, 1
      %p187 = por %p185, %p186
      %p189 = scmp.ne.s32.totalorder %s174, %s188
      %p190 = scmp.eq.s32.totalorder %s28, 0
      %p191 = por %p189, %p190
      %s193 = sadd.s32 %s192, 1
      %p196 = scmp.eq.s32.totalorder %s22, 1
      %p197 = scmp.ne.s32.totalorder %s192, %s194
      %p198 = scmp.eq.s32.totalorder %s22, 0
      %p199 = por %p197, %p198
      %p200 = scmp.ne.s32.totalorder %s192, %s194
      %p201 = scmp.eq.s32.totalorder %s27, 1
      %p202 = por %p200, %p201
      %p203 = scmp.ne.s32.totalorder %s194, %s195
      %p204 = scmp.eq.s32.totalorder %s27, 0
      %p205 = por %p203, %p204
      %p206 = scmp.ne.s32.totalorder %s194, %s195
      %p207 = scmp.eq.s32.totalorder %s28, 1
      %p208 = por %p206, %p207
      %p210 = scmp.ne.s32.totalorder %s195, %s209
      %p211 = scmp.eq.s32.totalorder %s28, 0
      %p212 = por %p210, %p211
      %s213 = ssub.s32 %s22, %s29
      %p214 = scmp.eq.s32.totalorder %s213, 0
      %s216 = sadd.s32 %s215, 1
      %s217 = scalar_select %p214, %s215, %s216
      %p220 = pneg %p214
      %p221 = scmp.eq.s32.totalorder %s22, 1
      %p222 = por %p220, %p221
      %p223 = scmp.ne.s32.totalorder %s215, %s218
      %p224 = scmp.eq.s32.totalorder %s22, 0
      %p225 = por %p223, %p224
      %p226 = scmp.ne.s32.totalorder %s215, %s218
      %p227 = scmp.eq.s32.totalorder %s27, 1
      %p228 = por %p226, %p227
      %p229 = scmp.ne.s32.totalorder %s218, %s219
      %p230 = scmp.eq.s32.totalorder %s27, 0
      %p231 = por %p229, %p230
      %p232 = scmp.ne.s32.totalorder %s218, %s219
      %p233 = scmp.eq.s32.totalorder %s28, 1
      %p234 = por %p232, %p233
      %p236 = scmp.ne.s32.totalorder %s219, %s235
      %p237 = scmp.eq.s32.totalorder %s28, 0
      %p238 = por %p236, %p237
      %p239 = scmp.le.s32.totalorder 1, %s22
      %p240 = scmp.lt.s32.totalorder %s22, 3
      %p241 = pnand %p239, %p240
      %p242 = pneg %p241
      // Predicated region
      $region9: #{tpu_custom_call.1} parent=5 // pred_check
        _
      $region10: #{tpu_custom_call.1} parent=5 // pred_check_branch
        %244 = sbr.rel (%p241) target = $region12
      $region11: #{tpu_custom_call.1} parent=5 // pred_region
        %s245 = ssub.s32 %s22, 1
        // Predicated region
        $region13: #{tpu_custom_call.1} parent=11 // pred_check
          %p246 = pneg %p121
        $region14: #{tpu_custom_call.1} parent=11 // pred_check_branch
          %248 = sbr.rel (%p246) target = $region16
        $region15: #{tpu_custom_call.1} parent=11 // pred_region
          %s250 = ssub.s32 1024, 1024
          %251 = vsyncadd [#allocation6], %s250
          %s252 = sshll.u32 [#allocation5], 4
          %s253 = int_to_ptr.vmem [resolvable:$true] %s252
          %258 = dma.hbm_to_vmem [thread:$0]  %s3, 1024, %s253, [#allocation6], 64, 64, 4
        $region16: #{tpu_custom_call.1} parent=11 // pred_fallthru
          _
        // Predicated region
        $region17: #{tpu_custom_call.1} parent=11 // pred_check
          %p259 = pneg %p142
        $region18: #{tpu_custom_call.1} parent=11 // pred_check_branch
          %261 = sbr.rel (%p259) target = $region20
        $region19: #{tpu_custom_call.1} parent=11 // pred_region
          %s263 = ssub.s32 8192, 8192
          %264 = vsyncadd [#allocation6], %s263
          %s265 = sshll.u32 [#allocation7], 4
          %s266 = int_to_ptr.vmem [resolvable:$true] %s265
          %271 = dma.hbm_to_vmem [thread:$0]  %s4, 8192, %s266, [#allocation6], 64, 64, 4
        $region20: #{tpu_custom_call.1} parent=11 // pred_fallthru
          _
        // Predicated region
        $region21: #{tpu_custom_call.1} parent=11 // pred_check
          %p272 = pneg %p163
        $region22: #{tpu_custom_call.1} parent=11 // pred_check_branch
          %274 = sbr.rel (%p272) target = $region24
        $region23: #{tpu_custom_call.1} parent=11 // pred_region
          _
        $region24: #{tpu_custom_call.1} parent=11 // pred_fallthru
          _
        // Predicated region
        $region25: #{tpu_custom_call.1} parent=11 // pred_check
          %p275 = pneg %p184
        $region26: #{tpu_custom_call.1} parent=11 // pred_check_branch
          %277 = sbr.rel (%p275) target = $region28
        $region27: #{tpu_custom_call.1} parent=11 // pred_region
          %s279 = ssub.s32 1024, 1024
          %280 = vsyncadd [#allocation9], %s279
          %s281 = sshll.u32 [#allocation8], 4
          %s282 = int_to_ptr.vmem [resolvable:$true] %s281
          %287 = dma.hbm_to_vmem [thread:$0]  %s6, 1024, %s282, [#allocation9], 64, 64, 4
        $region28: #{tpu_custom_call.1} parent=11 // pred_fallthru
          _
        // Predicated region
        $region29: #{tpu_custom_call.1} parent=11 // pred_check
          %p288 = pneg %p205
        $region30: #{tpu_custom_call.1} parent=11 // pred_check_branch
          %290 = sbr.rel (%p288) target = $region32
        $region31: #{tpu_custom_call.1} parent=11 // pred_region
          _
        $region32: #{tpu_custom_call.1} parent=11 // pred_fallthru
          _
      $region12: #{tpu_custom_call.1} parent=5 // pred_fallthru
        _
      %p291 = scmp.lt.s32.totalorder %s22, 2
      // Predicated region
      $region33: #{tpu_custom_call.1} parent=5 // pred_check
        %p292 = pneg %p291
      $region34: #{tpu_custom_call.1} parent=5 // pred_check_branch
        %294 = sbr.rel (%p292) target = $region36
      $region35: #{tpu_custom_call.1} parent=5 // pred_region
        // Predicated region
        $region37: #{tpu_custom_call.1} parent=35 // pred_check
          %p295 = pneg %p42
        $region38: #{tpu_custom_call.1} parent=35 // pred_check_branch
          %297 = sbr.rel (%p295) target = $region40
        $region39: #{tpu_custom_call.1} parent=35 // pred_region
          %s298 = smul.u32 2, %s22
          %p299 = scmp.lt.s32.totalorder %s298, 3
          %s300 = scalar_select %p299, %s298, 3
          %s301 = smul.addr %s300, 4
          %s302 = scalar_lea.vmem %s0, %s301
          %s303 = smul.u32 2, %s22
        $region40: #{tpu_custom_call.1} parent=35 // pred_fallthru
          _
        // Predicated region
        $region41: #{tpu_custom_call.1} parent=35 // pred_check
          %p304 = pneg %p68
        $region42: #{tpu_custom_call.1} parent=35 // pred_check_branch
          %306 = sbr.rel (%p304) target = $region44
        $region43: #{tpu_custom_call.1} parent=35 // pred_region
          %s307 = smul.u32 2, %s22
          %p308 = scmp.lt.s32.totalorder %s307, 3
          %s309 = scalar_select %p308, %s307, 3
          %s310 = smul.addr %s309, 8
          %s311 = scalar_lea.vmem %s1, %s310
          %s312 = smul.u32 2, %s22
        $region44: #{tpu_custom_call.1} parent=35 // pred_fallthru
          _
        // Predicated region
        $region45: #{tpu_custom_call.1} parent=35 // pred_check
          %p313 = pneg %p94
        $region46: #{tpu_custom_call.1} parent=35 // pred_check_branch
          %315 = sbr.rel (%p313) target = $region48
        $region47: #{tpu_custom_call.1} parent=35 // pred_region
          %s316 = sand.u32 %s84, 1
          %s317 = scalar_lea.sflag [#allocation3], %s316
          %s318 = sand.u32 %s84, 1
          %s319 = smul.addr %s318, 64
          %s320 = scalar_lea.vmem [#allocation2], %s319
          %s321 = smul.u32 2, %s22
          %s323 = ssub.s32 1024, 1024
          %324 = vsyncadd %s317, %s323
          %s325 = smul.addr %s321, 8
          %s326 = smul.addr %s325, 64
          %s327 = scalar_lea.hbm %s2, %s326
          %s328 = sshll.u32 %s320, 4
          %s329 = int_to_ptr.vmem [resolvable:$true] %s328
          %334 = dma.hbm_to_vmem [thread:$0]  %s327, 1024, %s329, %s317, 512, 512, 32
        $region48: #{tpu_custom_call.1} parent=35 // pred_fallthru
          _
      $region36: #{tpu_custom_call.1} parent=5 // pred_fallthru
        _
      %p335 = scmp.le.s32.totalorder 1, %s22
      %p336 = scmp.lt.s32.totalorder %s22, 3
      %p337 = pnand %p335, %p336
      %p338 = pneg %p337
      // Predicated region
      $region49: #{tpu_custom_call.1} parent=5 // pred_check
        _
      $region50: #{tpu_custom_call.1} parent=5 // pred_check_branch
        %340 = sbr.rel (%p337) target = $region52
      $region51: #{tpu_custom_call.1} parent=5 // pred_region
        %s341 = ssub.s32 %s22, 1
        %s342 = sand.u32 %s87, 1
        %s343 = scalar_lea.sflag [#allocation3], %s342
        %s344 = sand.u32 %s87, 1
        %s345 = smul.addr %s344, 64
        %s346 = scalar_lea.vmem [#allocation2], %s345
        // Predicated region
        $region53: #{tpu_custom_call.1} parent=51 // pred_check
          %p347 = pneg %p100
        $region54: #{tpu_custom_call.1} parent=51 // pred_check_branch
          %349 = sbr.rel (%p347) target = $region56
        $region55: #{tpu_custom_call.1} parent=51 // pred_region
          %350 = dma.done %s343, 1024
        $region56: #{tpu_custom_call.1} parent=51 // pred_fallthru
          _
        // Predicated region
        $region57: #{tpu_custom_call.1} parent=51 // pred_check
          %p351 = pneg %p121
        $region58: #{tpu_custom_call.1} parent=51 // pred_check_branch
          %353 = sbr.rel (%p351) target = $region60
        $region59: #{tpu_custom_call.1} parent=51 // pred_region
          %354 = dma.done [#allocation6], 1024
        $region60: #{tpu_custom_call.1} parent=51 // pred_fallthru
          _
        // Predicated region
        $region61: #{tpu_custom_call.1} parent=51 // pred_check
          %p355 = pneg %p142
        $region62: #{tpu_custom_call.1} parent=51 // pred_check_branch
          %357 = sbr.rel (%p355) target = $region64
        $region63: #{tpu_custom_call.1} parent=51 // pred_region
          %358 = dma.done [#allocation6], 8192
        $region64: #{tpu_custom_call.1} parent=51 // pred_fallthru
          _
        // Predicated region
        $region65: #{tpu_custom_call.1} parent=51 // pred_check
          %p359 = pneg %p184
        $region66: #{tpu_custom_call.1} parent=51 // pred_check_branch
          %361 = sbr.rel (%p359) target = $region68
        $region67: #{tpu_custom_call.1} parent=51 // pred_region
          %362 = dma.done [#allocation9], 1024
        $region68: #{tpu_custom_call.1} parent=51 // pred_fallthru
          _
        %s363 = smul.u32 2, %s27
        %p364 = scmp.lt.s32.totalorder %s363, 3
        %s365 = scalar_select %p364, %s363, 3
        %s366 = smul.addr %s365, 4
        %s367 = scalar_lea.vmem %s0, %s366
        %p368 = pneg %p48
        %p369 = pneg %p45
        %s370 = smul.u32 2, %s27
        %p371 = scmp.lt.s32.totalorder %s370, 3
        %s372 = scalar_select %p371, %s370, 3
        %s373 = smul.addr %s372, 8
        %s374 = scalar_lea.vmem %s1, %s373
        %p375 = pneg %p74
        %p376 = pneg %p71
        %s377 = sand.u32 %s87, 1
        %s378 = scalar_lea.sflag [#allocation3], %s377
        %s379 = sand.u32 %s87, 1
        %s380 = smul.addr %s379, 64
        %s381 = scalar_lea.vmem [#allocation2], %s380
        %p382 = pneg %p100
        %p383 = pneg %p97
        %p384 = pneg %p121
        %p385 = pneg %p118
        %p386 = pneg %p142
        %p387 = pneg %p139
        %p388 = pneg %p163
        %p389 = pneg %p160
        %p390 = pneg %p184
        %p391 = pneg %p181
        %p392 = pneg %p205
        %p393 = pneg %p202
        %p394 = pneg %p231
        %p395 = pneg %p228
        %s396 = sand.u32 %s218, 1
        %s397 = scalar_lea.sflag [#allocation4], %s396
        %s398 = sand.u32 %s218, 1
        %s399 = smul.addr %s398, 8
        %s400 = scalar_lea.vmem [#allocation10], %s399
        %s401 = smul.u32 2, %s27
        %p402 = scmp.lt.s32.totalorder %s401, 3
        %s403 = scalar_select %p402, %s401, 3
        %s404 = smul.addr %s403, 4
        %s405 = scalar_lea.vmem %s0, %s404
        %s406 = smul.u32 2, %s27
        %s407 = smul.u32 2, %s27
        %p408 = scmp.lt.s32.totalorder %s407, 3
        %s409 = scalar_select %p408, %s407, 3
        %s410 = smul.addr %s409, 8
        %s411 = scalar_lea.vmem %s1, %s410
        %s412 = smul.u32 2, %s27
        %s413 = smul.u32 2, %s27
        %s414 = smul.u32 2, %s27
        %v416 = vld [vmem:[%s405] sm:$0xf]
        %v417 = vld [vmem:[%s405 + $0x4] sm:$0xf]
        %v418 = vld [vmem:[%s411] sm:$0xff]
        %v419 = vld [vmem:[%s411 + $0x8] sm:$0xff]
        %v420 = vlaneseq
        %v421 = vand.u32 %v420, 127
        %422 = vset.pattern.permute.xlu0 0
        %423 = vperm.xlu0 %422, %v418
        %v424 = vpop.permute.xlu0 %423
        %425 = vset.pattern.permute.xlu0 0
        %426 = vperm.xlu0 %425, %v419
        %v427 = vpop.permute.xlu0 %426
        %vm428 = vcmp.eq.s32.totalorder %v421, %v424
        %vm429 = vcmp.eq.s32.totalorder %v421, %v427
        %vm430 = vmpackc.low %vm428, %vm428
        %vm431 = vmpackc.low %vm429, %vm429
        %v432 = vsel %vm430, 0, %v416
        %v433 = vsel %vm431, 0, %v417
        %434 = vset.pattern.permute.xlu0 1
        %435 = vperm.xlu0 %434, %v418
        %v436 = vpop.permute.xlu0 %435
        %437 = vset.pattern.permute.xlu0 1
        %438 = vperm.xlu0 %437, %v419
        %v439 = vpop.permute.xlu0 %438
        %vm440 = vcmp.eq.s32.totalorder %v421, %v436
        %vm441 = vcmp.eq.s32.totalorder %v421, %v439
        %vm442 = vmpackc.low %vm440, %vm440
        %vm443 = vmpackc.low %vm441, %vm441
        %v444 = vsel %vm442, 0, %v432
        %v445 = vsel %vm443, 0, %v433
        %446 = vset.pattern.permute.xlu0 2
        %447 = vperm.xlu0 %446, %v418
        %v448 = vpop.permute.xlu0 %447
        %449 = vset.pattern.permute.xlu0 2
        %450 = vperm.xlu0 %449, %v419
        %v451 = vpop.permute.xlu0 %450
        %vm452 = vcmp.eq.s32.totalorder %v421, %v448
        %vm453 = vcmp.eq.s32.totalorder %v421, %v451
        %vm454 = vmpackc.low %vm452, %vm452
        %vm455 = vmpackc.low %vm453, %vm453
        %v456 = vsel %vm454, 0, %v444
        %v457 = vsel %vm455, 0, %v445
        %458 = vset.pattern.permute.xlu0 3
        %459 = vperm.xlu0 %458, %v418
        %v460 = vpop.permute.xlu0 %459
        %461 = vset.pattern.permute.xlu0 3
        %462 = vperm.xlu0 %461, %v419
        %v463 = vpop.permute.xlu0 %462
        %vm464 = vcmp.eq.s32.totalorder %v421, %v460
        %vm465 = vcmp.eq.s32.totalorder %v421, %v463
        %vm466 = vmpackc.low %vm464, %vm464
        %vm467 = vmpackc.low %vm465, %vm465
        %v468 = vsel %vm466, 0, %v456
        %v469 = vsel %vm467, 0, %v457
        %v470 = vld [vmem:[#allocation5] sm:$0xf]
        %v471 = vld [vmem:[#allocation5 + $0x4] sm:$0xf]
        %v472 = vld [vmem:[#allocation5 + $0x8] sm:$0xf]
        %v473 = vld [vmem:[#allocation5 + $0xc] sm:$0xf]
        %v474 = vld [vmem:[#allocation5 + $0x10] sm:$0xf]
        %v475 = vld [vmem:[#allocation5 + $0x14] sm:$0xf]
        %v476 = vld [vmem:[#allocation5 + $0x18] sm:$0xf]
        %v477 = vld [vmem:[#allocation5 + $0x1c] sm:$0xf]
        %v478 = vld [vmem:[#allocation5 + $0x20] sm:$0xf]
        %v479 = vld [vmem:[#allocation5 + $0x24] sm:$0xf]
        %v480 = vld [vmem:[#allocation5 + $0x28] sm:$0xf]
        %v481 = vld [vmem:[#allocation5 + $0x2c] sm:$0xf]
        %v482 = vld [vmem:[#allocation5 + $0x30] sm:$0xf]
        %v483 = vld [vmem:[#allocation5 + $0x34] sm:$0xf]
        %v484 = vld [vmem:[#allocation5 + $0x38] sm:$0xf]
        %v485 = vld [vmem:[#allocation5 + $0x3c] sm:$0xf]
        %v486 = vld [vmem:[%s346] sm:$0xff]
        %v487 = vld [vmem:[%s346 + $0x8] sm:$0xff]
        %v488 = vld [vmem:[%s346 + $0x10] sm:$0xff]
        %v489 = vld [vmem:[%s346 + $0x18] sm:$0xff]
        %v490 = vld [vmem:[%s346 + $0x20] sm:$0xff]
        %v491 = vld [vmem:[%s346 + $0x28] sm:$0xff]
        %v492 = vld [vmem:[%s346 + $0x30] sm:$0xff]
        %v493 = vld [vmem:[%s346 + $0x38] sm:$0xff]
        %v494 = vld [vmem:[#allocation7] sm:$0xf]
        %v495 = vld [vmem:[#allocation7 + $0x4] sm:$0xf]
        %v496 = vld [vmem:[#allocation7 + $0x8] sm:$0xf]
        %v497 = vld [vmem:[#allocation7 + $0xc] sm:$0xf]
        %v498 = vld [vmem:[#allocation7 + $0x10] sm:$0xf]
        %v499 = vld [vmem:[#allocation7 + $0x14] sm:$0xf]
        %v500 = vld [vmem:[#allocation7 + $0x18] sm:$0xf]
        %v501 = vld [vmem:[#allocation7 + $0x1c] sm:$0xf]
        %v502 = vld [vmem:[#allocation7 + $0x20] sm:$0xf]
        %v503 = vld [vmem:[#allocation7 + $0x24] sm:$0xf]
        %v504 = vld [vmem:[#allocation7 + $0x28] sm:$0xf]
        %v505 = vld [vmem:[#allocation7 + $0x2c] sm:$0xf]
        %v506 = vld [vmem:[#allocation7 + $0x30] sm:$0xf]
        %v507 = vld [vmem:[#allocation7 + $0x34] sm:$0xf]
        %v508 = vld [vmem:[#allocation7 + $0x38] sm:$0xf]
        %v509 = vld [vmem:[#allocation7 + $0x3c] sm:$0xf]
        %v510 = vld [vmem:[#allocation7 + $0x40] sm:$0xf]
        %v511 = vld [vmem:[#allocation7 + $0x44] sm:$0xf]
        %v512 = vld [vmem:[#allocation7 + $0x48] sm:$0xf]
        %v513 = vld [vmem:[#allocation7 + $0x4c] sm:$0xf]
        %v514 = vld [vmem:[#allocation7 + $0x50] sm:$0xf]
        %v515 = vld [vmem:[#allocation7 + $0x54] sm:$0xf]
        %v516 = vld [vmem:[#allocation7 + $0x58] sm:$0xf]
        %v517 = vld [vmem:[#allocation7 + $0x5c] sm:$0xf]
        %v518 = vld [vmem:[#allocation7 + $0x60] sm:$0xf]
        %v519 = vld [vmem:[#allocation7 + $0x64] sm:$0xf]
        %v520 = vld [vmem:[#allocation7 + $0x68] sm:$0xf]
        %v521 = vld [vmem:[#allocation7 + $0x6c] sm:$0xf]
        %v522 = vld [vmem:[#allocation7 + $0x70] sm:$0xf]
        %v523 = vld [vmem:[#allocation7 + $0x74] sm:$0xf]
        %v524 = vld [vmem:[#allocation7 + $0x78] sm:$0xf]
        %v525 = vld [vmem:[#allocation7 + $0x7c] sm:$0xf]
        %v526 = vld [vmem:[#allocation7 + $0x80] sm:$0xf]
        %v527 = vld [vmem:[#allocation7 + $0x84] sm:$0xf]
        %v528 = vld [vmem:[#allocation7 + $0x88] sm:$0xf]
        %v529 = vld [vmem:[#allocation7 + $0x8c] sm:$0xf]
        %v530 = vld [vmem:[#allocation7 + $0x90] sm:$0xf]
        %v531 = vld [vmem:[#allocation7 + $0x94] sm:$0xf]
        %v532 = vld [vmem:[#allocation7 + $0x98] sm:$0xf]
        %v533 = vld [vmem:[#allocation7 + $0x9c] sm:$0xf]
        %v534 = vld [vmem:[#allocation7 + $0xa0] sm:$0xf]
        %v535 = vld [vmem:[#allocation7 + $0xa4] sm:$0xf]
        %v536 = vld [vmem:[#allocation7 + $0xa8] sm:$0xf]
        %v537 = vld [vmem:[#allocation7 + $0xac] sm:$0xf]
        %v538 = vld [vmem:[#allocation7 + $0xb0] sm:$0xf]
        %v539 = vld [vmem:[#allocation7 + $0xb4] sm:$0xf]
        %v540 = vld [vmem:[#allocation7 + $0xb8] sm:$0xf]
        %v541 = vld [vmem:[#allocation7 + $0xbc] sm:$0xf]
        %v542 = vld [vmem:[#allocation7 + $0xc0] sm:$0xf]
        %v543 = vld [vmem:[#allocation7 + $0xc4] sm:$0xf]
        %v544 = vld [vmem:[#allocation7 + $0xc8] sm:$0xf]
        %v545 = vld [vmem:[#allocation7 + $0xcc] sm:$0xf]
        %v546 = vld [vmem:[#allocation7 + $0xd0] sm:$0xf]
        %v547 = vld [vmem:[#allocation7 + $0xd4] sm:$0xf]
        %v548 = vld [vmem:[#allocation7 + $0xd8] sm:$0xf]
        %v549 = vld [vmem:[#allocation7 + $0xdc] sm:$0xf]
        %v550 = vld [vmem:[#allocation7 + $0xe0] sm:$0xf]
        %v551 = vld [vmem:[#allocation7 + $0xe4] sm:$0xf]
        %v552 = vld [vmem:[#allocation7 + $0xe8] sm:$0xf]
        %v553 = vld [vmem:[#allocation7 + $0xec] sm:$0xf]
        %v554 = vld [vmem:[#allocation7 + $0xf0] sm:$0xf]
        %v555 = vld [vmem:[#allocation7 + $0xf4] sm:$0xf]
        %v556 = vld [vmem:[#allocation7 + $0xf8] sm:$0xf]
        %v557 = vld [vmem:[#allocation7 + $0xfc] sm:$0xf]
        %v558 = vld [vmem:[#allocation7 + $0x100] sm:$0xf]
        %v559 = vld [vmem:[#allocation7 + $0x104] sm:$0xf]
        %v560 = vld [vmem:[#allocation7 + $0x108] sm:$0xf]
        %v561 = vld [vmem:[#allocation7 + $0x10c] sm:$0xf]
        %v562 = vld [vmem:[#allocation7 + $0x110] sm:$0xf]
        %v563 = vld [vmem:[#allocation7 + $0x114] sm:$0xf]
        %v564 = vld [vmem:[#allocation7 + $0x118] sm:$0xf]
        %v565 = vld [vmem:[#allocation7 + $0x11c] sm:$0xf]
        %v566 = vld [vmem:[#allocation7 + $0x120] sm:$0xf]
        %v567 = vld [vmem:[#allocation7 + $0x124] sm:$0xf]
        %v568 = vld [vmem:[#allocation7 + $0x128] sm:$0xf]
        %v569 = vld [vmem:[#allocation7 + $0x12c] sm:$0xf]
        %v570 = vld [vmem:[#allocation7 + $0x130] sm:$0xf]
        %v571 = vld [vmem:[#allocation7 + $0x134] sm:$0xf]
        %v572 = vld [vmem:[#allocation7 + $0x138] sm:$0xf]
        %v573 = vld [vmem:[#allocation7 + $0x13c] sm:$0xf]
        %v574 = vld [vmem:[#allocation7 + $0x140] sm:$0xf]
        %v575 = vld [vmem:[#allocation7 + $0x144] sm:$0xf]
        %v576 = vld [vmem:[#allocation7 + $0x148] sm:$0xf]
        %v577 = vld [vmem:[#allocation7 + $0x14c] sm:$0xf]
        %v578 = vld [vmem:[#allocation7 + $0x150] sm:$0xf]
        %v579 = vld [vmem:[#allocation7 + $0x154] sm:$0xf]
        %v580 = vld [vmem:[#allocation7 + $0x158] sm:$0xf]
        %v581 = vld [vmem:[#allocation7 + $0x15c] sm:$0xf]
        %v582 = vld [vmem:[#allocation7 + $0x160] sm:$0xf]
        %v583 = vld [vmem:[#allocation7 + $0x164] sm:$0xf]
        %v584 = vld [vmem:[#allocation7 + $0x168] sm:$0xf]
        %v585 = vld [vmem:[#allocation7 + $0x16c] sm:$0xf]
        %v586 = vld [vmem:[#allocation7 + $0x170] sm:$0xf]
        %v587 = vld [vmem:[#allocation7 + $0x174] sm:$0xf]
        %v588 = vld [vmem:[#allocation7 + $0x178] sm:$0xf]
        %v589 = vld [vmem:[#allocation7 + $0x17c] sm:$0xf]
        %v590 = vld [vmem:[#allocation7 + $0x180] sm:$0xf]
        %v591 = vld [vmem:[#allocation7 + $0x184] sm:$0xf]
        %v592 = vld [vmem:[#allocation7 + $0x188] sm:$0xf]
        %v593 = vld [vmem:[#allocation7 + $0x18c] sm:$0xf]
        %v594 = vld [vmem:[#allocation7 + $0x190] sm:$0xf]
        %v595 = vld [vmem:[#allocation7 + $0x194] sm:$0xf]
        %v596 = vld [vmem:[#allocation7 + $0x198] sm:$0xf]
        %v597 = vld [vmem:[#allocation7 + $0x19c] sm:$0xf]
        %v598 = vld [vmem:[#allocation7 + $0x1a0] sm:$0xf]
        %v599 = vld [vmem:[#allocation7 + $0x1a4] sm:$0xf]
        %v600 = vld [vmem:[#allocation7 + $0x1a8] sm:$0xf]
        %v601 = vld [vmem:[#allocation7 + $0x1ac] sm:$0xf]
        %v602 = vld [vmem:[#allocation7 + $0x1b0] sm:$0xf]
        %v603 = vld [vmem:[#allocation7 + $0x1b4] sm:$0xf]
        %v604 = vld [vmem:[#allocation7 + $0x1b8] sm:$0xf]
        %v605 = vld [vmem:[#allocation7 + $0x1bc] sm:$0xf]
        %v606 = vld [vmem:[#allocation7 + $0x1c0] sm:$0xf]
        %v607 = vld [vmem:[#allocation7 + $0x1c4] sm:$0xf]
        %v608 = vld [vmem:[#allocation7 + $0x1c8] sm:$0xf]
        %v609 = vld [vmem:[#allocation7 + $0x1cc] sm:$0xf]
        %v610 = vld [vmem:[#allocation7 + $0x1d0] sm:$0xf]
        %v611 = vld [vmem:[#allocation7 + $0x1d4] sm:$0xf]
        %v612 = vld [vmem:[#allocation7 + $0x1d8] sm:$0xf]
        %v613 = vld [vmem:[#allocation7 + $0x1dc] sm:$0xf]
        %v614 = vld [vmem:[#allocation7 + $0x1e0] sm:$0xf]
        %v615 = vld [vmem:[#allocation7 + $0x1e4] sm:$0xf]
        %v616 = vld [vmem:[#allocation7 + $0x1e8] sm:$0xf]
        %v617 = vld [vmem:[#allocation7 + $0x1ec] sm:$0xf]
        %v618 = vld [vmem:[#allocation7 + $0x1f0] sm:$0xf]
        %v619 = vld [vmem:[#allocation7 + $0x1f4] sm:$0xf]
        %v620 = vld [vmem:[#allocation7 + $0x1f8] sm:$0xf]
        %v621 = vld [vmem:[#allocation7 + $0x1fc] sm:$0xf]
        %v630 = vunpack.c.l.b16 %v486
        %v631 = vunpack.c.h.b16 %v486
        %v632 = vunpack.c.l.b16 %v487
        %v633 = vunpack.c.h.b16 %v487
        %v634 = vunpack.c.l.b16 %v488
        %v635 = vunpack.c.h.b16 %v488
        %v636 = vunpack.c.l.b16 %v489
        %v637 = vunpack.c.h.b16 %v489
        %v638 = vunpack.c.l.b16 %v490
        %v639 = vunpack.c.h.b16 %v490
        %v640 = vunpack.c.l.b16 %v491
        %v641 = vunpack.c.h.b16 %v491
        %v642 = vunpack.c.l.b16 %v492
        %v643 = vunpack.c.h.b16 %v492
        %v644 = vunpack.c.l.b16 %v493
        %v645 = vunpack.c.h.b16 %v493
        %v646 = vpack.c.b16 %v638, %v630
        %v647 = vpack.c.b16 %v639, %v631
        %v648 = vpack.c.b16 %v640, %v632
        %v649 = vpack.c.b16 %v641, %v633
        %v650 = vpack.c.b16 %v642, %v634
        %v651 = vpack.c.b16 %v643, %v635
        %v652 = vpack.c.b16 %v644, %v636
        %v653 = vpack.c.b16 %v645, %v637
        %v790 = vunpack.c.l.b16 %v494
        %v791 = vunpack.c.l.b16 %v495
        %v792 = vunpack.c.l.b16 %v496
        %v793 = vunpack.c.l.b16 %v497
        %v794 = vunpack.c.l.b16 %v498
        %v795 = vunpack.c.l.b16 %v499
        %v796 = vunpack.c.l.b16 %v500
        %v797 = vunpack.c.l.b16 %v501
        %v798 = vunpack.c.l.b16 %v502
        %v799 = vunpack.c.l.b16 %v503
        %v800 = vunpack.c.l.b16 %v504
        %v801 = vunpack.c.l.b16 %v505
        %v802 = vunpack.c.l.b16 %v506
        %v803 = vunpack.c.l.b16 %v507
        %v804 = vunpack.c.l.b16 %v508
        %v805 = vunpack.c.l.b16 %v509
        %v806 = vunpack.c.l.b16 %v510
        %v807 = vunpack.c.l.b16 %v511
        %v808 = vunpack.c.l.b16 %v512
        %v809 = vunpack.c.l.b16 %v513
        %v810 = vunpack.c.l.b16 %v514
        %v811 = vunpack.c.l.b16 %v515
        %v812 = vunpack.c.l.b16 %v516
        %v813 = vunpack.c.l.b16 %v517
        %v814 = vunpack.c.l.b16 %v518
        %v815 = vunpack.c.l.b16 %v519
        %v816 = vunpack.c.l.b16 %v520
        %v817 = vunpack.c.l.b16 %v521
        %v818 = vunpack.c.l.b16 %v522
        %v819 = vunpack.c.l.b16 %v523
        %v820 = vunpack.c.l.b16 %v524
        %v821 = vunpack.c.l.b16 %v525
        %v822 = vunpack.c.l.b16 %v526
        %v823 = vunpack.c.l.b16 %v527
        %v824 = vunpack.c.l.b16 %v528
        %v825 = vunpack.c.l.b16 %v529
        %v826 = vunpack.c.l.b16 %v530
        %v827 = vunpack.c.l.b16 %v531
        %v828 = vunpack.c.l.b16 %v532
        %v829 = vunpack.c.l.b16 %v533
        %v830 = vunpack.c.l.b16 %v534
        %v831 = vunpack.c.l.b16 %v535
        %v832 = vunpack.c.l.b16 %v536
        %v833 = vunpack.c.l.b16 %v537
        %v834 = vunpack.c.l.b16 %v538
        %v835 = vunpack.c.l.b16 %v539
        %v836 = vunpack.c.l.b16 %v540
        %v837 = vunpack.c.l.b16 %v541
        %v838 = vunpack.c.l.b16 %v542
        %v839 = vunpack.c.l.b16 %v543
        %v840 = vunpack.c.l.b16 %v544
        %v841 = vunpack.c.l.b16 %v545
        %v842 = vunpack.c.l.b16 %v546
        %v843 = vunpack.c.l.b16 %v547
        %v844 = vunpack.c.l.b16 %v548
        %v845 = vunpack.c.l.b16 %v549
        %v846 = vunpack.c.l.b16 %v550
        %v847 = vunpack.c.l.b16 %v551
        %v848 = vunpack.c.l.b16 %v552
        %v849 = vunpack.c.l.b16 %v553
        %v850 = vunpack.c.l.b16 %v554
        %v851 = vunpack.c.l.b16 %v555
        %v852 = vunpack.c.l.b16 %v556
        %v853 = vunpack.c.l.b16 %v557
        %v854 = vunpack.c.l.b16 %v558
        %v855 = vunpack.c.l.b16 %v559
        %v856 = vunpack.c.l.b16 %v560
        %v857 = vunpack.c.l.b16 %v561
        %v858 = vunpack.c.l.b16 %v562
        %v859 = vunpack.c.l.b16 %v563
        %v860 = vunpack.c.l.b16 %v564
        %v861 = vunpack.c.l.b16 %v565
        %v862 = vunpack.c.l.b16 %v566
        %v863 = vunpack.c.l.b16 %v567
        %v864 = vunpack.c.l.b16 %v568
        %v865 = vunpack.c.l.b16 %v569
        %v866 = vunpack.c.l.b16 %v570
        %v867 = vunpack.c.l.b16 %v571
        %v868 = vunpack.c.l.b16 %v572
        %v869 = vunpack.c.l.b16 %v573
        %v870 = vunpack.c.l.b16 %v574
        %v871 = vunpack.c.l.b16 %v575
        %v872 = vunpack.c.l.b16 %v576
        %v873 = vunpack.c.l.b16 %v577
        %v874 = vunpack.c.l.b16 %v578
        %v875 = vunpack.c.l.b16 %v579
        %v876 = vunpack.c.l.b16 %v580
        %v877 = vunpack.c.l.b16 %v581
        %v878 = vunpack.c.l.b16 %v582
        %v879 = vunpack.c.l.b16 %v583
        %v880 = vunpack.c.l.b16 %v584
        %v881 = vunpack.c.l.b16 %v585
        %v882 = vunpack.c.l.b16 %v586
        %v883 = vunpack.c.l.b16 %v587
        %v884 = vunpack.c.l.b16 %v588
        %v885 = vunpack.c.l.b16 %v589
        %v886 = vunpack.c.l.b16 %v590
        %v887 = vunpack.c.l.b16 %v591
        %v888 = vunpack.c.l.b16 %v592
        %v889 = vunpack.c.l.b16 %v593
        %v890 = vunpack.c.l.b16 %v594
        %v891 = vunpack.c.l.b16 %v595
        %v892 = vunpack.c.l.b16 %v596
        %v893 = vunpack.c.l.b16 %v597
        %v894 = vunpack.c.l.b16 %v598
        %v895 = vunpack.c.l.b16 %v599
        %v896 = vunpack.c.l.b16 %v600
        %v897 = vunpack.c.l.b16 %v601
        %v898 = vunpack.c.l.b16 %v602
        %v899 = vunpack.c.l.b16 %v603
        %v900 = vunpack.c.l.b16 %v604
        %v901 = vunpack.c.l.b16 %v605
        %v902 = vunpack.c.l.b16 %v606
        %v903 = vunpack.c.l.b16 %v607
        %v904 = vunpack.c.l.b16 %v608
        %v905 = vunpack.c.l.b16 %v609
        %v906 = vunpack.c.l.b16 %v610
        %v907 = vunpack.c.l.b16 %v611
        %v908 = vunpack.c.l.b16 %v612
        %v909 = vunpack.c.l.b16 %v613
        %v910 = vunpack.c.l.b16 %v614
        %v911 = vunpack.c.l.b16 %v615
        %v912 = vunpack.c.l.b16 %v616
        %v913 = vunpack.c.l.b16 %v617
        %v914 = vunpack.c.l.b16 %v618
        %v915 = vunpack.c.l.b16 %v619
        %v916 = vunpack.c.l.b16 %v620
        %v917 = vunpack.c.l.b16 %v621
        %v918 = vpack.c.b16 %v791, %v790
        %v919 = vpack.c.b16 %v793, %v792
        %v920 = vpack.c.b16 %v795, %v794
        %v921 = vpack.c.b16 %v797, %v796
        %v922 = vpack.c.b16 %v799, %v798
        %v923 = vpack.c.b16 %v801, %v800
        %v924 = vpack.c.b16 %v803, %v802
        %v925 = vpack.c.b16 %v805, %v804
        %v926 = vpack.c.b16 %v807, %v806
        %v927 = vpack.c.b16 %v809, %v808
        %v928 = vpack.c.b16 %v811, %v810
        %v929 = vpack.c.b16 %v813, %v812
        %v930 = vpack.c.b16 %v815, %v814
        %v931 = vpack.c.b16 %v817, %v816
        %v932 = vpack.c.b16 %v819, %v818
        %v933 = vpack.c.b16 %v821, %v820
        %v934 = vpack.c.b16 %v823, %v822
        %v935 = vpack.c.b16 %v825, %v824
        %v936 = vpack.c.b16 %v827, %v826
        %v937 = vpack.c.b16 %v829, %v828
        %v938 = vpack.c.b16 %v831, %v830
        %v939 = vpack.c.b16 %v833, %v832
        %v940 = vpack.c.b16 %v835, %v834
        %v941 = vpack.c.b16 %v837, %v836
        %v942 = vpack.c.b16 %v839, %v838
        %v943 = vpack.c.b16 %v841, %v840
        %v944 = vpack.c.b16 %v843, %v842
        %v945 = vpack.c.b16 %v845, %v844
        %v946 = vpack.c.b16 %v847, %v846
        %v947 = vpack.c.b16 %v849, %v848
        %v948 = vpack.c.b16 %v851, %v850
        %v949 = vpack.c.b16 %v853, %v852
        %v950 = vpack.c.b16 %v855, %v854
        %v951 = vpack.c.b16 %v857, %v856
        %v952 = vpack.c.b16 %v859, %v858
        %v953 = vpack.c.b16 %v861, %v860
        %v954 = vpack.c.b16 %v863, %v862
        %v955 = vpack.c.b16 %v865, %v864
        %v956 = vpack.c.b16 %v867, %v866
        %v957 = vpack.c.b16 %v869, %v868
        %v958 = vpack.c.b16 %v871, %v870
        %v959 = vpack.c.b16 %v873, %v872
        %v960 = vpack.c.b16 %v875, %v874
        %v961 = vpack.c.b16 %v877, %v876
        %v962 = vpack.c.b16 %v879, %v878
        %v963 = vpack.c.b16 %v881, %v880
        %v964 = vpack.c.b16 %v883, %v882
        %v965 = vpack.c.b16 %v885, %v884
        %v966 = vpack.c.b16 %v887, %v886
        %v967 = vpack.c.b16 %v889, %v888
        %v968 = vpack.c.b16 %v891, %v890
        %v969 = vpack.c.b16 %v893, %v892
        %v970 = vpack.c.b16 %v895, %v894
        %v971 = vpack.c.b16 %v897, %v896
        %v972 = vpack.c.b16 %v899, %v898
        %v973 = vpack.c.b16 %v901, %v900
        %v974 = vpack.c.b16 %v903, %v902
        %v975 = vpack.c.b16 %v905, %v904
        %v976 = vpack.c.b16 %v907, %v906
        %v977 = vpack.c.b16 %v909, %v908
        %v978 = vpack.c.b16 %v911, %v910
        %v979 = vpack.c.b16 %v913, %v912
        %v980 = vpack.c.b16 %v915, %v914
        %v981 = vpack.c.b16 %v917, %v916
        %1046 = vmatprep.subr.bf16.mxu0 0
        %1047 = vmatpush1.bf16.msra.mxu0 %v918
        %1048 = vmatprep.subr.bf16.mxu0 0
        %1049 = vmatpush1.bf16.msra.mxu0 %v919
        %1050 = vmatprep.subr.bf16.mxu0 0
        %1051 = vmatpush1.bf16.msra.mxu0 %v920
        %1052 = vmatprep.subr.bf16.mxu0 0
        %1053 = vmatpush1.bf16.msra.mxu0 %v921
        %1054 = vmatprep.subr.bf16.mxu0 0
        %1055 = vmatpush1.bf16.msra.mxu0 %v922
        %1056 = vmatprep.subr.bf16.mxu0 0
        %1057 = vmatpush1.bf16.msra.mxu0 %v923
        %1058 = vmatprep.subr.bf16.mxu0 0
        %1059 = vmatpush1.bf16.msra.mxu0 %v924
        %1060 = vmatprep.subr.bf16.mxu0 0
        %1061 = vmatpush1.bf16.msra.mxu0 %v925
        %1062 = vmatprep.subr.bf16.mxu0 0
        %1063 = vmatpush1.bf16.msra.mxu0 %v926
        %1064 = vmatprep.subr.bf16.mxu0 0
        %1065 = vmatpush1.bf16.msra.mxu0 %v927
        %1066 = vmatprep.subr.bf16.mxu0 0
        %1067 = vmatpush1.bf16.msra.mxu0 %v928
        %1068 = vmatprep.subr.bf16.mxu0 0
        %1069 = vmatpush1.bf16.msra.mxu0 %v929
        %1070 = vmatprep.subr.bf16.mxu0 0
        %1071 = vmatpush1.bf16.msra.mxu0 %v930
        %1072 = vmatprep.subr.bf16.mxu0 0
        %1073 = vmatpush1.bf16.msra.mxu0 %v931
        %1074 = vmatprep.subr.bf16.mxu0 0
        %1075 = vmatpush1.bf16.msra.mxu0 %v932
        %1076 = vmatprep.subr.bf16.mxu0 0
        %1077 = vmatpush1.bf16.msra.mxu0 %v933
        %1078 = vmatprep.mubr.bf16.mxu0 %v647
        %1079 = vmatmul.mubr.bf16.gmra.mrb[0].mxu0 %v646
        %v1080 = vpop.f32.mrb[0].mxu0
        %v1081 = vadd.f32 0.0, %v1080
        %v1082 = vpop.f32.mrb[0].mxu0
        %v1083 = vpop.f32.mrb[0].mxu0
        %v1084 = vadd.f32 0.0, %v1083
        %v1085 = vpop.f32.mrb[0].mxu0
        %1086 = vdwg.mxu0
        %1087 = vmatprep.subr.bf16.mxu0 0
        %1088 = vmatpush1.bf16.msra.mxu0 %v934
        %1089 = vmatprep.subr.bf16.mxu0 0
        %1090 = vmatpush1.bf16.msra.mxu0 %v935
        %1091 = vmatprep.subr.bf16.mxu0 0
        %1092 = vmatpush1.bf16.msra.mxu0 %v936
        %1093 = vmatprep.subr.bf16.mxu0 0
        %1094 = vmatpush1.bf16.msra.mxu0 %v937
        %1095 = vmatprep.subr.bf16.mxu0 0
        %1096 = vmatpush1.bf16.msra.mxu0 %v938
        %1097 = vmatprep.subr.bf16.mxu0 0
        %1098 = vmatpush1.bf16.msra.mxu0 %v939
        %1099 = vmatprep.subr.bf16.mxu0 0
        %1100 = vmatpush1.bf16.msra.mxu0 %v940
        %1101 = vmatprep.subr.bf16.mxu0 0
        %1102 = vmatpush1.bf16.msra.mxu0 %v941
        %1103 = vmatprep.subr.bf16.mxu0 0
        %1104 = vmatpush1.bf16.msra.mxu0 %v942
        %1105 = vmatprep.subr.bf16.mxu0 0
        %1106 = vmatpush1.bf16.msra.mxu0 %v943
        %1107 = vmatprep.subr.bf16.mxu0 0
        %1108 = vmatpush1.bf16.msra.mxu0 %v944
        %1109 = vmatprep.subr.bf16.mxu0 0
        %1110 = vmatpush1.bf16.msra.mxu0 %v945
        %1111 = vmatprep.subr.bf16.mxu0 0
        %1112 = vmatpush1.bf16.msra.mxu0 %v946
        %1113 = vmatprep.subr.bf16.mxu0 0
        %1114 = vmatpush1.bf16.msra.mxu0 %v947
        %1115 = vmatprep.subr.bf16.mxu0 0
        %1116 = vmatpush1.bf16.msra.mxu0 %v948
        %1117 = vmatprep.subr.bf16.mxu0 0
        %1118 = vmatpush1.bf16.msra.mxu0 %v949
        %1119 = vmatprep.mubr.bf16.mxu0 %v649
        %1120 = vmatmul.mubr.bf16.gmra.mrb[0].mxu0 %v648
        %v1121 = vpop.f32.mrb[0].mxu0
        %v1122 = vadd.f32 %v1081, %v1121
        %v1123 = vpop.f32.mrb[0].mxu0
        %v1124 = vpop.f32.mrb[0].mxu0
        %v1125 = vadd.f32 %v1084, %v1124
        %v1126 = vpop.f32.mrb[0].mxu0
        %1127 = vdwg.mxu0
        %1128 = vmatprep.subr.bf16.mxu0 0
        %1129 = vmatpush1.bf16.msra.mxu0 %v950
        %1130 = vmatprep.subr.bf16.mxu0 0
        %1131 = vmatpush1.bf16.msra.mxu0 %v951
        %1132 = vmatprep.subr.bf16.mxu0 0
        %1133 = vmatpush1.bf16.msra.mxu0 %v952
        %1134 = vmatprep.subr.bf16.mxu0 0
        %1135 = vmatpush1.bf16.msra.mxu0 %v953
        %1136 = vmatprep.subr.bf16.mxu0 0
        %1137 = vmatpush1.bf16.msra.mxu0 %v954
        %1138 = vmatprep.subr.bf16.mxu0 0
        %1139 = vmatpush1.bf16.msra.mxu0 %v955
        %1140 = vmatprep.subr.bf16.mxu0 0
        %1141 = vmatpush1.bf16.msra.mxu0 %v956
        %1142 = vmatprep.subr.bf16.mxu0 0
        %1143 = vmatpush1.bf16.msra.mxu0 %v957
        %1144 = vmatprep.subr.bf16.mxu0 0
        %1145 = vmatpush1.bf16.msra.mxu0 %v958
        %1146 = vmatprep.subr.bf16.mxu0 0
        %1147 = vmatpush1.bf16.msra.mxu0 %v959
        %1148 = vmatprep.subr.bf16.mxu0 0
        %1149 = vmatpush1.bf16.msra.mxu0 %v960
        %1150 = vmatprep.subr.bf16.mxu0 0
        %1151 = vmatpush1.bf16.msra.mxu0 %v961
        %1152 = vmatprep.subr.bf16.mxu0 0
        %1153 = vmatpush1.bf16.msra.mxu0 %v962
        %1154 = vmatprep.subr.bf16.mxu0 0
        %1155 = vmatpush1.bf16.msra.mxu0 %v963
        %1156 = vmatprep.subr.bf16.mxu0 0
        %1157 = vmatpush1.bf16.msra.mxu0 %v964
        %1158 = vmatprep.subr.bf16.mxu0 0
        %1159 = vmatpush1.bf16.msra.mxu0 %v965
        %1160 = vmatprep.mubr.bf16.mxu0 %v651
        %1161 = vmatmul.mubr.bf16.gmra.mrb[0].mxu0 %v650
        %v1162 = vpop.f32.mrb[0].mxu0
        %v1163 = vadd.f32 %v1122, %v1162
        %v1164 = vpop.f32.mrb[0].mxu0
        %v1165 = vpop.f32.mrb[0].mxu0
        %v1166 = vadd.f32 %v1125, %v1165
        %v1167 = vpop.f32.mrb[0].mxu0
        %1168 = vdwg.mxu0
        %1169 = vmatprep.subr.bf16.mxu0 0
        %1170 = vmatpush1.bf16.msra.mxu0 %v966
        %1171 = vmatprep.subr.bf16.mxu0 0
        %1172 = vmatpush1.bf16.msra.mxu0 %v967
        %1173 = vmatprep.subr.bf16.mxu0 0
        %1174 = vmatpush1.bf16.msra.mxu0 %v968
        %1175 = vmatprep.subr.bf16.mxu0 0
        %1176 = vmatpush1.bf16.msra.mxu0 %v969
        %1177 = vmatprep.subr.bf16.mxu0 0
        %1178 = vmatpush1.bf16.msra.mxu0 %v970
        %1179 = vmatprep.subr.bf16.mxu0 0
        %1180 = vmatpush1.bf16.msra.mxu0 %v971
        %1181 = vmatprep.subr.bf16.mxu0 0
        %1182 = vmatpush1.bf16.msra.mxu0 %v972
        %1183 = vmatprep.subr.bf16.mxu0 0
        %1184 = vmatpush1.bf16.msra.mxu0 %v973
        %1185 = vmatprep.subr.bf16.mxu0 0
        %1186 = vmatpush1.bf16.msra.mxu0 %v974
        %1187 = vmatprep.subr.bf16.mxu0 0
        %1188 = vmatpush1.bf16.msra.mxu0 %v975
        %1189 = vmatprep.subr.bf16.mxu0 0
        %1190 = vmatpush1.bf16.msra.mxu0 %v976
        %1191 = vmatprep.subr.bf16.mxu0 0
        %1192 = vmatpush1.bf16.msra.mxu0 %v977
        %1193 = vmatprep.subr.bf16.mxu0 0
        %1194 = vmatpush1.bf16.msra.mxu0 %v978
        %1195 = vmatprep.subr.bf16.mxu0 0
        %1196 = vmatpush1.bf16.msra.mxu0 %v979
        %1197 = vmatprep.subr.bf16.mxu0 0
        %1198 = vmatpush1.bf16.msra.mxu0 %v980
        %1199 = vmatprep.subr.bf16.mxu0 0
        %1200 = vmatpush1.bf16.msra.mxu0 %v981
        %1201 = vmatprep.mubr.bf16.mxu0 %v653
        %1202 = vmatmul.mubr.bf16.gmra.mrb[0].mxu0 %v652
        %v1203 = vpop.f32.mrb[0].mxu0
        %v1204 = vadd.f32 %v1163, %v1203
        %v1205 = vpop.f32.mrb[0].mxu0
        %v1206 = vpop.f32.mrb[0].mxu0
        %v1207 = vadd.f32 %v1166, %v1206
        %v1208 = vpop.f32.mrb[0].mxu0
        %1209 = vdwg.mxu0
        %v1212 = vunpack.c.l.b16 %v468
        %v1213 = vunpack.c.l.b16 %v469
        %v1214 = vpack.c.b16 %v1213, %v1212
        %v1232 = vunpack.c.l.b16 %v470
        %v1233 = vunpack.c.l.b16 %v471
        %v1234 = vunpack.c.l.b16 %v472
        %v1235 = vunpack.c.l.b16 %v473
        %v1236 = vunpack.c.l.b16 %v474
        %v1237 = vunpack.c.l.b16 %v475
        %v1238 = vunpack.c.l.b16 %v476
        %v1239 = vunpack.c.l.b16 %v477
        %v1240 = vunpack.c.l.b16 %v478
        %v1241 = vunpack.c.l.b16 %v479
        %v1242 = vunpack.c.l.b16 %v480
        %v1243 = vunpack.c.l.b16 %v481
        %v1244 = vunpack.c.l.b16 %v482
        %v1245 = vunpack.c.l.b16 %v483
        %v1246 = vunpack.c.l.b16 %v484
        %v1247 = vunpack.c.l.b16 %v485
        %v1248 = vpack.c.b16 %v1233, %v1232
        %v1249 = vpack.c.b16 %v1235, %v1234
        %v1250 = vpack.c.b16 %v1237, %v1236
        %v1251 = vpack.c.b16 %v1239, %v1238
        %v1252 = vpack.c.b16 %v1241, %v1240
        %v1253 = vpack.c.b16 %v1243, %v1242
        %v1254 = vpack.c.b16 %v1245, %v1244
        %v1255 = vpack.c.b16 %v1247, %v1246
        %1264 = vmatprep.subr.bf16.mxu0 0
        %1265 = vmatpush1.bf16.msra.mxu0 %v1248
        %1266 = vmatprep.subr.bf16.mxu0 0
        %1267 = vmatpush1.bf16.msra.mxu0 %v1249
        %1268 = vmatprep.subr.bf16.mxu0 0
        %1269 = vmatpush1.bf16.msra.mxu0 %v1250
        %1270 = vmatprep.subr.bf16.mxu0 0
        %1271 = vmatpush1.bf16.msra.mxu0 %v1251
        %1272 = vmatprep.subr.bf16.mxu0 0
        %1273 = vmatpush1.bf16.msra.mxu0 %v1252
        %1274 = vmatprep.subr.bf16.mxu0 0
        %1275 = vmatpush1.bf16.msra.mxu0 %v1253
        %1276 = vmatprep.subr.bf16.mxu0 0
        %1277 = vmatpush1.bf16.msra.mxu0 %v1254
        %1278 = vmatprep.subr.bf16.mxu0 0
        %1279 = vmatpush1.bf16.msra.mxu0 %v1255
        %1280 = vmatprep.subr.bf16.mxu0 0
        %1281 = vmatpush1.bf16.msra.mxu0 0
        %1282 = vmatprep.subr.bf16.mxu0 0
        %1283 = vmatpush1.bf16.msra.mxu0 0
        %1284 = vmatprep.subr.bf16.mxu0 0
        %1285 = vmatpush1.bf16.msra.mxu0 0
        %1286 = vmatprep.subr.bf16.mxu0 0
        %1287 = vmatpush1.bf16.msra.mxu0 0
        %1288 = vmatprep.subr.bf16.mxu0 0
        %1289 = vmatpush1.bf16.msra.mxu0 0
        %1290 = vmatprep.subr.bf16.mxu0 0
        %1291 = vmatpush1.bf16.msra.mxu0 0
        %1292 = vmatprep.subr.bf16.mxu0 0
        %1293 = vmatpush1.bf16.msra.mxu0 0
        %1294 = vmatprep.subr.bf16.mxu0 0
        %1295 = vmatpush1.bf16.msra.mxu0 0
        %1296 = vmatprep.mubr.bf16.mxu0 0
        %1297 = vmatmul.mubr.bf16.gmra.mrb[0].mxu0 %v1214
        %v1298 = vpop.f32.mrb[0].mxu0
        %v1299 = vadd.f32 %v1204, %v1298
        %v1300 = vpop.f32.mrb[0].mxu0
        %v1301 = vpop.f32.mrb[0].mxu0
        %v1302 = vadd.f32 %v1207, %v1301
        %v1303 = vpop.f32.mrb[0].mxu0
        %1304 = vdwg.mxu0
        %v1305 = vld [vmem:[%s5] sm:$0x1]
        %v1307 = vlaneseq
        %v1308 = vshrl.u32 %v1307, 7
        %v1309 = vsub.s32 0, %v1308
        %v1310 = vrot.slane %v1305, %v1309
        %v1312 = vadd.f32 %v1299, %v1310
        %v1313 = vadd.f32 %v1302, %v1310
        %v1314 = vmax.f32 %v1312, 0.0
        %v1315 = vmax.f32 %v1313, 0.0
        %v1316 = vpack.c.bf16 %v1315, %v1314
        %v1317 = vld [vmem:[#allocation8] sm:$0xf]
        %v1318 = vld [vmem:[#allocation8 + $0x4] sm:$0xf]
        %v1319 = vld [vmem:[#allocation8 + $0x8] sm:$0xf]
        %v1320 = vld [vmem:[#allocation8 + $0xc] sm:$0xf]
        %v1321 = vld [vmem:[#allocation8 + $0x10] sm:$0xf]
        %v1322 = vld [vmem:[#allocation8 + $0x14] sm:$0xf]
        %v1323 = vld [vmem:[#allocation8 + $0x18] sm:$0xf]
        %v1324 = vld [vmem:[#allocation8 + $0x1c] sm:$0xf]
        %v1325 = vld [vmem:[#allocation8 + $0x20] sm:$0xf]
        %v1326 = vld [vmem:[#allocation8 + $0x24] sm:$0xf]
        %v1327 = vld [vmem:[#allocation8 + $0x28] sm:$0xf]
        %v1328 = vld [vmem:[#allocation8 + $0x2c] sm:$0xf]
        %v1329 = vld [vmem:[#allocation8 + $0x30] sm:$0xf]
        %v1330 = vld [vmem:[#allocation8 + $0x34] sm:$0xf]
        %v1331 = vld [vmem:[#allocation8 + $0x38] sm:$0xf]
        %v1332 = vld [vmem:[#allocation8 + $0x3c] sm:$0xf]
        %v1333 = vld [vmem:[%s7] sm:$0x1]
        %v1335 = vlaneseq
        %v1336 = vshrl.u32 %v1335, 7
        %v1337 = vsub.s32 0, %v1336
        %v1338 = vrot.slane %v1333, %v1337
        %v1356 = vunpack.c.l.b16 %v1317
        %v1357 = vunpack.c.l.b16 %v1318
        %v1358 = vunpack.c.l.b16 %v1319
        %v1359 = vunpack.c.l.b16 %v1320
        %v1360 = vunpack.c.l.b16 %v1321
        %v1361 = vunpack.c.l.b16 %v1322
        %v1362 = vunpack.c.l.b16 %v1323
        %v1363 = vunpack.c.l.b16 %v1324
        %v1364 = vunpack.c.l.b16 %v1325
        %v1365 = vunpack.c.l.b16 %v1326
        %v1366 = vunpack.c.l.b16 %v1327
        %v1367 = vunpack.c.l.b16 %v1328
        %v1368 = vunpack.c.l.b16 %v1329
        %v1369 = vunpack.c.l.b16 %v1330
        %v1370 = vunpack.c.l.b16 %v1331
        %v1371 = vunpack.c.l.b16 %v1332
        %v1372 = vpack.c.b16 %v1357, %v1356
        %v1373 = vpack.c.b16 %v1359, %v1358
        %v1374 = vpack.c.b16 %v1361, %v1360
        %v1375 = vpack.c.b16 %v1363, %v1362
        %v1376 = vpack.c.b16 %v1365, %v1364
        %v1377 = vpack.c.b16 %v1367, %v1366
        %v1378 = vpack.c.b16 %v1369, %v1368
        %v1379 = vpack.c.b16 %v1371, %v1370
        %1388 = vmatprep.subr.bf16.mxu0 0
        %1389 = vmatpush1.bf16.msra.mxu0 %v1372
        %1390 = vmatprep.subr.bf16.mxu0 0
        %1391 = vmatpush1.bf16.msra.mxu0 %v1373
        %1392 = vmatprep.subr.bf16.mxu0 0
        %1393 = vmatpush1.bf16.msra.mxu0 %v1374
        %1394 = vmatprep.subr.bf16.mxu0 0
        %1395 = vmatpush1.bf16.msra.mxu0 %v1375
        %1396 = vmatprep.subr.bf16.mxu0 0
        %1397 = vmatpush1.bf16.msra.mxu0 %v1376
        %1398 = vmatprep.subr.bf16.mxu0 0
        %1399 = vmatpush1.bf16.msra.mxu0 %v1377
        %1400 = vmatprep.subr.bf16.mxu0 0
        %1401 = vmatpush1.bf16.msra.mxu0 %v1378
        %1402 = vmatprep.subr.bf16.mxu0 0
        %1403 = vmatpush1.bf16.msra.mxu0 %v1379
        %1404 = vmatprep.subr.bf16.mxu0 0
        %1405 = vmatpush1.bf16.msra.mxu0 0
        %1406 = vmatprep.subr.bf16.mxu0 0
        %1407 = vmatpush1.bf16.msra.mxu0 0
        %1408 = vmatprep.subr.bf16.mxu0 0
        %1409 = vmatpush1.bf16.msra.mxu0 0
        %1410 = vmatprep.subr.bf16.mxu0 0
        %1411 = vmatpush1.bf16.msra.mxu0 0
        %1412 = vmatprep.subr.bf16.mxu0 0
        %1413 = vmatpush1.bf16.msra.mxu0 0
        %1414 = vmatprep.subr.bf16.mxu0 0
        %1415 = vmatpush1.bf16.msra.mxu0 0
        %1416 = vmatprep.subr.bf16.mxu0 0
        %1417 = vmatpush1.bf16.msra.mxu0 0
        %1418 = vmatprep.subr.bf16.mxu0 0
        %1419 = vmatpush1.bf16.msra.mxu0 0
        %1420 = vmatprep.mubr.bf16.mxu0 0
        %1421 = vmatmul.mubr.bf16.gmra.mrb[0].mxu0 %v1316
        %v1422 = vpop.f32.mrb[0].mxu0
        %v1423 = vadd.f32 %v1338, %v1422
        %v1424 = vpop.f32.mrb[0].mxu0
        %v1425 = vpop.f32.mrb[0].mxu0
        %v1426 = vadd.f32 %v1338, %v1425
        %v1427 = vpop.f32.mrb[0].mxu0
        %1428 = vdwg.mxu0
        %v1429 = vpack.c.bf16 %v1426, %v1423
        %v1431 = vunpack.c.l.b16 %v1429
        %v1432 = vunpack.c.h.b16 %v1429
        %v1433 = vpack.c.b16 %v1431, %v1431
        %v1434 = vpack.c.b16 %v1432, %v1432
        %1437 = vst [vmem:[%s400] sm:$0xf] %v1433
        %1438 = vst [vmem:[%s400 + $0x4] sm:$0xf] %v1434
        %s1439 = sand.u32 %s218, 1
        %s1440 = scalar_lea.sflag [#allocation4], %s1439
        %s1441 = sand.u32 %s218, 1
        %s1442 = smul.addr %s1441, 8
        %s1443 = scalar_lea.vmem [#allocation10], %s1442
        // Predicated region
        $region69: #{tpu_custom_call.1} parent=51 // pred_check
          %p1444 = pneg %p228
        $region70: #{tpu_custom_call.1} parent=51 // pred_check_branch
          %1446 = sbr.rel (%p1444) target = $region72
        $region71: #{tpu_custom_call.1} parent=51 // pred_region
          %s1447 = smul.u32 2, %s27
          %s1449 = ssub.s32 128, 128
          %1450 = vsyncadd %s1440, %s1449
          %s1451 = smul.addr %s1447, 64
          %s1452 = scalar_lea.hbm %s8, %s1451
          %s1453 = sshll.u32 %s1443, 4
          %s1454 = int_to_ptr.vmem [resolvable:$true] %s1453
          %1459 = dma.vmem_to_hbm [thread:$0]  %s1454, 128, %s1452, %s1440, 64, 64, 4
        $region72: #{tpu_custom_call.1} parent=51 // pred_fallthru
          _
      $region52: #{tpu_custom_call.1} parent=5 // pred_fallthru
        _
      %p1460 = scmp.le.s32.totalorder 2, %s22
      // Predicated region
      $region73: #{tpu_custom_call.1} parent=5 // pred_check
        %p1461 = pneg %p1460
      $region74: #{tpu_custom_call.1} parent=5 // pred_check_branch
        %1463 = sbr.rel (%p1461) target = $region76
      $region75: #{tpu_custom_call.1} parent=5 // pred_region
        %s1464 = ssub.s32 %s22, 2
        // Predicated region
        $region77: #{tpu_custom_call.1} parent=75 // pred_check
          %p1465 = pneg %p234
        $region78: #{tpu_custom_call.1} parent=75 // pred_check_branch
          %1467 = sbr.rel (%p1465) target = $region80
        $region79: #{tpu_custom_call.1} parent=75 // pred_region
          %s1468 = sand.u32 %s219, 1
          %s1469 = scalar_lea.sflag [#allocation4], %s1468
          %s1470 = sand.u32 %s219, 1
          %s1471 = smul.addr %s1470, 8
          %s1472 = scalar_lea.vmem [#allocation10], %s1471
          %1473 = dma.done %s1469, 128
        $region80: #{tpu_custom_call.1} parent=75 // pred_fallthru
          _
      $region76: #{tpu_custom_call.1} parent=5 // pred_fallthru
        _
    $region6: #{tpu_custom_call.1} parent=1 // loop_footer
      %s26 = sadd.s32 1, %s22
    $region7: #{tpu_custom_call.1} parent=1 // loop_footer_branch
      %21 = sbr.rel target = $region3
    $region8: #{tpu_custom_call.1} parent=1 // loop_exit
      _
    %1474 = vsyncpa [#allocation3], 1
    %s1475 = scalar_lea.sflag [#allocation3], 1
    %1476 = vsyncpa %s1475, 1
    %1477 = vsyncpa [#allocation6], 1
    %1478 = vsyncpa [#allocation9], 1
    %1479 = vsyncpa [#allocation4], 1
    %s1480 = scalar_lea.sflag [#allocation4], 1
    %1481 = vsyncpa %s1480, 1

</llo_original>
